<compile_context>
chip_gen: v7x
topology: tpu7x:2x2x1
jax: 0.10.0
libtpu: 0.0.40
codegen_flags: <defaults>
</compile_context>

<pallas_src>
import functools

import jax
import jax.numpy as jnp
import numpy as np
from jax.experimental import pallas as pl
from jax.experimental.pallas import tpu as pltpu


# -----------------------------------------------------------------------------
# Generation-aware VMEM budget
# -----------------------------------------------------------------------------
_VMEM_LIMIT_CACHE = None


def _vmem_limit_bytes():
    """~75% of physical VMEM (v5e/v6e: 128 MiB -> 96 MiB, v7x: 64 MiB -> 48 MiB)."""
    global _VMEM_LIMIT_CACHE
    if _VMEM_LIMIT_CACHE is None:
        try:
            cap = pltpu.get_tpu_info().vmem_capacity_bytes
        except Exception:
            cap = 64 * 1024 * 1024  # conservative fallback (fits every generation)
        _VMEM_LIMIT_CACHE = int(cap * 3 // 4)
    return _VMEM_LIMIT_CACHE


# -----------------------------------------------------------------------------
# Shared LSTM cell / recurrence step
# -----------------------------------------------------------------------------
def _lstm_cell(gates, c, H):
    # PyTorch gate order i, f, g, o.  Elementwise math stays f32 (v5e has no bf16 VPU/EUP).
    i = jax.nn.sigmoid(gates[:, 0 * H:1 * H])
    f = jax.nn.sigmoid(gates[:, 1 * H:2 * H])
    g = jnp.tanh(gates[:, 2 * H:3 * H])
    o = jax.nn.sigmoid(gates[:, 3 * H:4 * H])
    c_new = f * c + i * g
    return o * jnp.tanh(c_new), c_new


def _make_step(gx_ref, w_hh, T, B, H, fuse_hh, track_max, emit):
    """Build one fori_loop step: fw + bw cell updates, optional running max, emit stores."""
    G = 4 * H

    def step(s, carry):
        if track_max:
            h_fw, c_fw, h_bw, c_bw, m_fw, m_bw = carry
        else:
            h_fw, c_fw, h_bw, c_bw = carry
        tr = T - 1 - s
        # Row starts are multiples of 8 by construction (batch padded to 8 sublanes).
        row_f = pl.multiple_of(s * B, 8)
        row_b = pl.multiple_of(tr * B, 8)
        gx_f = gx_ref[pl.ds(row_f, B), :]    # (B, 8H) precomputed x-gate preactivations
        gx_b = gx_ref[pl.ds(row_b, B), :]

        if fuse_hh:
            # One MXU push for both directions against a block-diagonal (2H, 8H) W_hh.
            h_cat = jnp.concatenate([h_fw, h_bw], axis=1).astype(jnp.bfloat16)
            g_all = jnp.dot(h_cat, w_hh, preferred_element_type=jnp.float32)
            g_fw = gx_f[:, :G] + g_all[:, :G]
            g_bw = gx_b[:, G:] + g_all[:, G:]
        else:
            w0, w1 = w_hh
            g_fw = gx_f[:, :G] + jnp.dot(h_fw.astype(jnp.bfloat16), w0,
                                         preferred_element_type=jnp.float32)
            g_bw = gx_b[:, G:] + jnp.dot(h_bw.astype(jnp.bfloat16), w1,
                                         preferred_element_type=jnp.float32)

        h_fw, c_fw = _lstm_cell(g_fw, c_fw, H)
        h_bw, c_bw = _lstm_cell(g_bw, c_bw, H)
        emit(row_f, row_b, h_fw, h_bw)

        if track_max:
            m_fw = jnp.maximum(m_fw, h_fw)
            m_bw = jnp.maximum(m_bw, h_bw)
            return h_fw, c_fw, h_bw, c_bw, m_fw, m_bw
        return h_fw, c_fw, h_bw, c_bw

    return step


# -----------------------------------------------------------------------------
# Kernel 1: bidirectional LSTM layer that emits the full hidden sequence
# (used for layer 0; output consumed directly by the next kernel).
# -----------------------------------------------------------------------------
def _bilstm_seq_kernel(x_ref, w_ih_ref, w_hh_ref, b_ref, out_ref, gx_ref,
                       *, T, B, H, unroll, fuse_hh):
    """
    x_ref:    (T*B, I)   f32   time-major flattened input
    w_ih_ref: (I, 8H)    bf16  [W_ih_fw | W_ih_bw], gate order i,f,g,o
    w_hh_ref: (2H, 8H)   bf16  block-diagonal (fuse_hh) OR (2, H, 4H) stacked
    b_ref:    (1, 8H)    f32   combined biases (b_ih + b_hh), fw|bw
    out_ref:  (T*B, 2H)  f32   hidden sequence, fw in [:, :H], bw in [:, H:]
    gx_ref:   (T*B, 8H)  f32   scratch: hoisted input-gate preactivations
    """
    # Phase 1: one big MXU GEMM over all timesteps and both directions.
    gx_ref[...] = (
        jnp.dot(x_ref[...].astype(jnp.bfloat16), w_ih_ref[...],
                preferred_element_type=jnp.float32)
        + b_ref[...]
    )

    w_hh = w_hh_ref[...] if fuse_hh else (w_hh_ref[0], w_hh_ref[1])

    def emit(row_f, row_b, h_fw, h_bw):
        # Direct per-step stores: no hidden-sequence scratches, no final concat pass.
        out_ref[pl.ds(row_f, B), 0:H] = h_fw
        out_ref[pl.ds(row_b, B), H:2 * H] = h_bw

    step = _make_step(gx_ref, w_hh, T, B, H, fuse_hh, track_max=False, emit=emit)
    z = jnp.zeros((B, H), jnp.float32)
    jax.lax.fori_loop(0, T, step, (z, z, z, z), unroll=unroll)


def bilstm_layer(x_flat, w_ih_cat, w_hh, b_cat, *, seq_len, batch, hidden, fuse_hh):
    T, B, H = seq_len, batch, hidden
    # TODO(synk): sweep unroll in {2,4,8} against vreg spill for H >= 256.
    unroll = T if T <= 32 else 8
    kernel = functools.partial(_bilstm_seq_kernel, T=T, B=B, H=H,
                               unroll=unroll, fuse_hh=fuse_hh)
    return pl.pallas_call(
        kernel,
        out_shape=jax.ShapeDtypeStruct((T * B, 2 * H), jnp.float32),
        scratch_shapes=[pltpu.VMEM((T * B, 8 * H), jnp.float32)],
        compiler_params=pltpu.CompilerParams(vmem_limit_bytes=_vmem_limit_bytes()),
    )(x_flat, w_ih_cat, w_hh, b_cat)


# -----------------------------------------------------------------------------
# Kernel 2: bidirectional LSTM layer fused with max-over-time + Linear epilogue
# (used for layer 1 — the hidden sequence never leaves the kernel).
# -----------------------------------------------------------------------------
def _bilstm_maxfc_kernel(x_ref, w_ih_ref, w_hh_ref, b_ref, w_fc_ref, b_fc_ref,
                         out_ref, gx_ref, *, T, B, H, unroll, fuse_hh):
    """
    x_ref:    (T*B, 2H_prev) f32, w_ih_ref: (2H_prev, 8H) bf16, w_hh_ref: as above,
    b_ref: (1, 8H) f32, w_fc_ref: (2H, C) bf16, b_fc_ref: (1, C) f32,
    out_ref: (B, C) f32, gx_ref: (T*B, 8H) f32 scratch.
    """
    gx_ref[...] = (
        jnp.dot(x_ref[...].astype(jnp.bfloat16), w_ih_ref[...],
                preferred_element_type=jnp.float32)
        + b_ref[...]
    )

    w_hh = w_hh_ref[...] if fuse_hh else (w_hh_ref[0], w_hh_ref[1])

    def emit(row_f, row_b, h_fw, h_bw):
        pass  # hidden states live only in the carry; only the running max matters

    step = _make_step(gx_ref, w_hh, T, B, H, fuse_hh, track_max=True, emit=emit)
    z = jnp.zeros((B, H), jnp.float32)
    ninf = jnp.full((B, H), -jnp.inf, jnp.float32)
    carry = jax.lax.fori_loop(0, T, step, (z, z, z, z, ninf, ninf), unroll=unroll)
    _, _, _, _, m_fw, m_bw = carry

    # Fused max-over-time + Linear epilogue.
    m = jnp.concatenate([m_fw, m_bw], axis=1).astype(jnp.bfloat16)   # (B, 2H)
    out_ref[...] = (
        jnp.dot(m, w_fc_ref[...], preferred_element_type=jnp.float32)
        + b_fc_ref[...]
    )


def bilstm_max_fc(x_flat, w_ih_cat, w_hh, b_cat, w_fc_t, b_fc,
                  *, seq_len, batch, hidden, fuse_hh):
    T, B, H = seq_len, batch, hidden
    C = w_fc_t.shape[1]
    unroll = T if T <= 32 else 8
    kernel = functools.partial(_bilstm_maxfc_kernel, T=T, B=B, H=H,
                               unroll=unroll, fuse_hh=fuse_hh)
    return pl.pallas_call(
        kernel,
        out_shape=jax.ShapeDtypeStruct((B, C), jnp.float32),
        scratch_shapes=[pltpu.VMEM((T * B, 8 * H), jnp.float32)],
        compiler_params=pltpu.CompilerParams(vmem_limit_bytes=_vmem_limit_bytes()),
    )(x_flat, w_ih_cat, w_hh, b_cat, w_fc_t, b_fc)


# -----------------------------------------------------------------------------
# Weight preparation (pre-transposed / stacked; MXU operands in bf16)
# -----------------------------------------------------------------------------
def _prep_layer_weights(w_ih_f, w_hh_f, b_f, w_ih_b, w_hh_b, b_b):
    H = w_hh_f.shape[1]
    w_ih_cat = jnp.concatenate([w_ih_f.T, w_ih_b.T], axis=1).astype(jnp.bfloat16)  # (I, 8H)
    b_cat = jnp.concatenate([b_f, b_b]).reshape(1, 8 * H).astype(jnp.float32)       # (1, 8H)
    fuse_hh = 8 * H <= 256  # both gate sets fit one MXU pass -> block-diag fusion
    if fuse_hh:
        w_hh = jnp.zeros((2 * H, 8 * H), jnp.float32)
        w_hh = w_hh.at[:H, :4 * H].set(w_hh_f.T)
        w_hh = w_hh.at[H:, 4 * H:].set(w_hh_b.T)
        w_hh = w_hh.astype(jnp.bfloat16)                                             # (2H, 8H)
    else:
        w_hh = jnp.stack([w_hh_f.T, w_hh_b.T]).astype(jnp.bfloat16)                  # (2, H, 4H)
    return w_ih_cat, w_hh, b_cat, fuse_hh, H


# -----------------------------------------------------------------------------
# Full forward pass (matches RNN_stacked_block.forward in eval mode).
# -----------------------------------------------------------------------------
def rnn_stacked_block_forward(x_bti, params):
    x = jnp.asarray(x_bti, jnp.float32)
    B, T, I = x.shape
    Bp = ((B + 7) // 8) * 8                          # pad batch to a full sublane group
    x = jnp.transpose(x, (1, 0, 2))                  # (T, B, I) time-major
    if Bp != B:
        x = jnp.pad(x, ((0, 0), (0, Bp - B), (0, 0)))
    x_flat = x.reshape(T * Bp, I)                    # f32; bf16 cast happens in-kernel

    # ---- layer 0: BiLSTM emitting the (T*Bp, 2H) hidden slab for layer 1
    w_ih0, w_hh0, b0, fuse0, H0 = _prep_layer_weights(
        params["w_ih_l0"], params["w_hh_l0"], params["b_l0"],
        params["w_ih_l0_rev"], params["w_hh_l0_rev"], params["b_l0_rev"])
    h_flat = bilstm_layer(x_flat, w_ih0, w_hh0, b0,
                          seq_len=T, batch=Bp, hidden=H0, fuse_hh=fuse0)

    # ---- layer 1: BiLSTM fused with max-over-time + Linear epilogue
    w_ih1, w_hh1, b1, fuse1, H1 = _prep_layer_weights(
        params["w_ih_l1"], params["w_hh_l1"], params["b_l1"],
        params["w_ih_l1_rev"], params["w_hh_l1_rev"], params["b_l1_rev"])

    # TODO(synk): nn.Dropout(p=0.5) is identity in eval mode; training-mode RNG
    # masking (pltpu.prng_seed / prng_random_bits) not implemented.
    w_fc_t = jnp.asarray(params["w_fc"].T, jnp.bfloat16)              # (2H, C)
    b_fc = jnp.asarray(params["b_fc"], jnp.float32).reshape(1, -1)    # (1, C)

    out = bilstm_max_fc(h_flat, w_ih1, w_hh1, b1, w_fc_t, b_fc,
                        seq_len=T, batch=Bp, hidden=H1, fuse_hh=fuse1)  # (Bp, C)
    return out[:B]                                                      # (B, num_classes)


# -----------------------------------------------------------------------------
# Pure-JAX reference (for correctness check)
# -----------------------------------------------------------------------------
def _ref_lstm_direction(x_tbi, w_ih, w_hh, b, reverse):
    T, B, _ = x_tbi.shape
    H = w_hh.shape[1]
    xs = x_tbi[::-1] if reverse else x_tbi

    def step(carry, x_t):
        h, c = carry
        gates = x_t @ w_ih.T + h @ w_hh.T + b
        i = jax.nn.sigmoid(gates[:, :H])
        f = jax.nn.sigmoid(gates[:, H:2 * H])
        g = jnp.tanh(gates[:, 2 * H:3 * H])
        o = jax.nn.sigmoid(gates[:, 3 * H:])
        c = f * c + i * g
        h = o * jnp.tanh(c)
        return (h, c), h

    init = (jnp.zeros((B, H), jnp.float32), jnp.zeros((B, H), jnp.float32))
    _, hs = jax.lax.scan(step, init, xs)
    return hs[::-1] if reverse else hs


def _ref_forward(x_bti, params):
    h = jnp.transpose(x_bti, (1, 0, 2))
    for layer in range(2):
        fw = _ref_lstm_direction(
            h, params[f"w_ih_l{layer}"], params[f"w_hh_l{layer}"],
            params[f"b_l{layer}"], reverse=False)
        bw = _ref_lstm_direction(
            h, params[f"w_ih_l{layer}_rev"], params[f"w_hh_l{layer}_rev"],
            params[f"b_l{layer}_rev"], reverse=True)
        h = jnp.concatenate([fw, bw], axis=-1)
    m = jnp.max(h, axis=0)
    return m @ params["w_fc"].T + params["b_fc"]


# -----------------------------------------------------------------------------
# Deterministic parameter init (PyTorch-style uniform(-1/sqrt(H), 1/sqrt(H)))
# -----------------------------------------------------------------------------
def init_params(key, input_size, hidden_size, num_classes):
    params = {}
    k = 1.0 / np.sqrt(hidden_size)
    layer_inputs = [input_size, 2 * hidden_size]
    keys = jax.random.split(key, 18)
    ki = 0
    for layer in range(2):
        in_sz = layer_inputs[layer]
        for suffix in ("", "_rev"):
            w_ih = jax.random.uniform(keys[ki], (4 * hidden_size, in_sz),
                                      minval=-k, maxval=k, dtype=jnp.float32); ki += 1
            w_hh = jax.random.uniform(keys[ki], (4 * hidden_size, hidden_size),
                                      minval=-k, maxval=k, dtype=jnp.float32); ki += 1
            b_ih = jax.random.uniform(keys[ki], (4 * hidden_size,),
                                      minval=-k, maxval=k, dtype=jnp.float32); ki += 1
            b_hh = jax.random.uniform(keys[ki], (4 * hidden_size,),
                                      minval=-k, maxval=k, dtype=jnp.float32); ki += 1
            params[f"w_ih_l{layer}{suffix}"] = w_ih
            params[f"w_hh_l{layer}{suffix}"] = w_hh
            params[f"b_l{layer}{suffix}"] = b_ih + b_hh  # PyTorch adds both biases
    kf = 1.0 / np.sqrt(2 * hidden_size)
    params["w_fc"] = jax.random.uniform(keys[ki], (num_classes, 2 * hidden_size),
                                        minval=-kf, maxval=kf, dtype=jnp.float32); ki += 1
    params["b_fc"] = jax.random.uniform(keys[ki], (num_classes,),
                                        minval=-kf, maxval=kf, dtype=jnp.float32)
    return params


# -----------------------------------------------------------------------------
if __name__ == "__main__":
    # Small shapes consistent with the module: (batch, seq, input_size)
    B, T, I = 2, 8, 16
    HIDDEN, NUM_CLASSES = 32, 12

    root = jax.random.PRNGKey(0)
    k_x, k_p = jax.random.split(root)
    x = jax.random.normal(k_x, (B, T, I), dtype=jnp.float32)
    params = init_params(k_p, I, HIDDEN, NUM_CLASSES)

    out = rnn_stacked_block_forward(x, params)
    out = jax.block_until_ready(out)

    ref = jax.block_until_ready(_ref_forward(x, params))
    np.testing.assert_allclose(np.asarray(out), np.asarray(ref), rtol=5e-2, atol=5e-2)

    assert out.shape == (B, NUM_CLASSES)
    print("KERNEL_OK")
</pallas_src>

<mosaic_0001>
module attributes {stable_mosaic.version = 11 : i64} {
  func.func @_bilstm_seq_kernel(%arg0: memref<64x16xf32, #tpu.memory_space<vmem>>, %arg1: memref<16x256xbf16, #tpu.memory_space<vmem>>, %arg2: memref<64x256xbf16, #tpu.memory_space<vmem>>, %arg3: memref<1x256xf32, #tpu.memory_space<vmem>>, %arg4: memref<64x64xf32, #tpu.memory_space<vmem>>, %arg5: memref<64x256xf32, #tpu.memory_space<vmem>>) attributes {dimension_semantics = [], scalar_prefetch = 0 : i64, scratch_operands = 1 : i64, tpu.core_type = #tpu.core_type<tc>} {
    %c0 = arith.constant 0 : index
    %c0_0 = arith.constant 0 : index
    %0 = vector.load %arg0[%c0, %c0_0] : memref<64x16xf32, #tpu.memory_space<vmem>>, vector<64x16xf32>
    %1 = arith.truncf %0 : vector<64x16xf32> to vector<64x16xbf16>
    %c0_1 = arith.constant 0 : index
    %c0_2 = arith.constant 0 : index
    %2 = vector.load %arg1[%c0_1, %c0_2] : memref<16x256xbf16, #tpu.memory_space<vmem>>, vector<16x256xbf16>
    %cst = arith.constant dense<0.000000e+00> : vector<64x256xf32>
    %3 = tpu.matmul %1, %2, %cst {dimension_numbers = #tpu.dot_dimension_numbers<[1], [0], [0], [1], [0, 0, 1, 1], [], []>} : vector<64x16xbf16>, vector<16x256xbf16>, vector<64x256xf32> -> vector<64x256xf32>
    %c0_3 = arith.constant 0 : index
    %c0_4 = arith.constant 0 : index
    %4 = vector.load %arg3[%c0_3, %c0_4] : memref<1x256xf32, #tpu.memory_space<vmem>>, vector<1x256xf32>
    %5 = vector.broadcast %4 : vector<1x256xf32> to vector<64x256xf32>
    %6 = arith.addf %3, %5 : vector<64x256xf32>
    %c0_5 = arith.constant 0 : index
    %c0_6 = arith.constant 0 : index
    %7 = vector.load %arg5[%c0_5, %c0_6] : memref<64x256xf32, #tpu.memory_space<vmem>>, vector<64x256xf32>
    tpu.vector_store %arg5[%c0_5, %c0_6], %6 {strides = array<i32>} : memref<64x256xf32, #tpu.memory_space<vmem>>, vector<64x256xf32>,
    %c0_7 = arith.constant 0 : index
    %c0_8 = arith.constant 0 : index
    %8 = vector.load %arg2[%c0_7, %c0_8] : memref<64x256xbf16, #tpu.memory_space<vmem>>, vector<64x256xbf16>
    %cst_9 = arith.constant 0.000000e+00 : f32
    %9 = vector.broadcast %cst_9 : f32 to vector<8x32xf32>
    %c0_i32 = arith.constant 0 : i32
    %c7_i32 = arith.constant 7 : i32
    %10 = arith.subi %c7_i32, %c0_i32 : i32
    %c8_i32 = arith.constant 8 : i32
    %11 = arith.muli %c0_i32, %c8_i32 : i32
    %12 = tpu.assume_multiple %11, 8 : i32
    %c8_i32_10 = arith.constant 8 : i32
    %13 = arith.muli %10, %c8_i32_10 : i32
    %14 = tpu.assume_multiple %13, 8 : i32
    %15 = arith.index_cast %12 : i32 to index
    %c0_11 = arith.constant 0 : index
    %16 = vector.load %arg5[%15, %c0_11] : memref<64x256xf32, #tpu.memory_space<vmem>>, vector<8x256xf32>
    %17 = arith.index_cast %14 : i32 to index
    %c0_12 = arith.constant 0 : index
    %18 = vector.load %arg5[%17, %c0_12] : memref<64x256xf32, #tpu.memory_space<vmem>>, vector<8x256xf32>
    %19 = tpu.concatenate %9, %9 in 1 : vector<8x32xf32>, vector<8x32xf32> -> vector<8x64xf32>
    %20 = arith.truncf %19 : vector<8x64xf32> to vector<8x64xbf16>
    %cst_13 = arith.constant dense<0.000000e+00> : vector<8x256xf32>
    %21 = tpu.matmul %20, %8, %cst_13 {dimension_numbers = #tpu.dot_dimension_numbers<[1], [0], [0], [1], [0, 0, 1, 1], [], []>} : vector<8x64xbf16>, vector<64x256xbf16>, vector<8x256xf32> -> vector<8x256xf32>
    %22 = vector.extract_strided_slice %16 {offsets = [0, 0], sizes = [8, 128], strides = [1, 1]} : vector<8x256xf32> to vector<8x128xf32>
    %23 = vector.extract_strided_slice %21 {offsets = [0, 0], sizes = [8, 128], strides = [1, 1]} : vector<8x256xf32> to vector<8x128xf32>
    %24 = arith.addf %22, %23 : vector<8x128xf32>
    %25 = vector.extract_strided_slice %18 {offsets = [0, 128], sizes = [8, 128], strides = [1, 1]} : vector<8x256xf32> to vector<8x128xf32>
    %26 = vector.extract_strided_slice %21 {offsets = [0, 128], sizes = [8, 128], strides = [1, 1]} : vector<8x256xf32> to vector<8x128xf32>
    %27 = arith.addf %25, %26 : vector<8x128xf32>
    %28 = vector.extract_strided_slice %24 {offsets = [0, 0], sizes = [8, 32], strides = [1, 1]} : vector<8x128xf32> to vector<8x32xf32>
    %29 = arith.negf %28 : vector<8x32xf32>
    %30 = math.exp %29 : vector<8x32xf32>
    %cst_14 = arith.constant 1.000000e+00 : f32
    %31 = vector.broadcast %cst_14 : f32 to vector<8x32xf32>
    %32 = arith.addf %31, %30 : vector<8x32xf32>
    %33 = arith.divf %31, %32 : vector<8x32xf32>
    %34 = vector.extract_strided_slice %24 {offsets = [0, 32], sizes = [8, 32], strides = [1, 1]} : vector<8x128xf32> to vector<8x32xf32>
    %35 = arith.negf %34 : vector<8x32xf32>
    %36 = math.exp %35 : vector<8x32xf32>
    %cst_15 = arith.constant 1.000000e+00 : f32
    %37 = vector.broadcast %cst_15 : f32 to vector<8x32xf32>
    %38 = arith.addf %37, %36 : vector<8x32xf32>
    %39 = arith.divf %37, %38 : vector<8x32xf32>
    %40 = vector.extract_strided_slice %24 {offsets = [0, 64], sizes = [8, 32], strides = [1, 1]} : vector<8x128xf32> to vector<8x32xf32>
    %41 = math.tanh %40 : vector<8x32xf32>
    %42 = vector.extract_strided_slice %24 {offsets = [0, 96], sizes = [8, 32], strides = [1, 1]} : vector<8x128xf32> to vector<8x32xf32>
    %43 = arith.negf %42 : vector<8x32xf32>
    %44 = math.exp %43 : vector<8x32xf32>
    %cst_16 = arith.constant 1.000000e+00 : f32
    %45 = vector.broadcast %cst_16 : f32 to vector<8x32xf32>
    %46 = arith.addf %45, %44 : vector<8x32xf32>
    %47 = arith.divf %45, %46 : vector<8x32xf32>
    %48 = arith.mulf %39, %9 : vector<8x32xf32>
    %49 = arith.mulf %33, %41 : vector<8x32xf32>
    %50 = arith.addf %48, %49 : vector<8x32xf32>
    %51 = math.tanh %50 : vector<8x32xf32>
    %52 = arith.mulf %47, %51 : vector<8x32xf32>
    %53 = vector.extract_strided_slice %27 {offsets = [0, 0], sizes = [8, 32], strides = [1, 1]} : vector<8x128xf32> to vector<8x32xf32>
    %54 = arith.negf %53 : vector<8x32xf32>
    %55 = math.exp %54 : vector<8x32xf32>
    %cst_17 = arith.constant 1.000000e+00 : f32
    %56 = vector.broadcast %cst_17 : f32 to vector<8x32xf32>
    %57 = arith.addf %56, %55 : vector<8x32xf32>
    %58 = arith.divf %56, %57 : vector<8x32xf32>
    %59 = vector.extract_strided_slice %27 {offsets = [0, 32], sizes = [8, 32], strides = [1, 1]} : vector<8x128xf32> to vector<8x32xf32>
    %60 = arith.negf %59 : vector<8x32xf32>
    %61 = math.exp %60 : vector<8x32xf32>
    %cst_18 = arith.constant 1.000000e+00 : f32
    %62 = vector.broadcast %cst_18 : f32 to vector<8x32xf32>
    %63 = arith.addf %62, %61 : vector<8x32xf32>
    %64 = arith.divf %62, %63 : vector<8x32xf32>
    %65 = vector.extract_strided_slice %27 {offsets = [0, 64], sizes = [8, 32], strides = [1, 1]} : vector<8x128xf32> to vector<8x32xf32>
    %66 = math.tanh %65 : vector<8x32xf32>
    %67 = vector.extract_strided_slice %27 {offsets = [0, 96], sizes = [8, 32], strides = [1, 1]} : vector<8x128xf32> to vector<8x32xf32>
    %68 = arith.negf %67 : vector<8x32xf32>
    %69 = math.exp %68 : vector<8x32xf32>
    %cst_19 = arith.constant 1.000000e+00 : f32
    %70 = vector.broadcast %cst_19 : f32 to vector<8x32xf32>
    %71 = arith.addf %70, %69 : vector<8x32xf32>
    %72 = arith.divf %70, %71 : vector<8x32xf32>
    %73 = arith.mulf %64, %9 : vector<8x32xf32>
    %74 = arith.mulf %58, %66 : vector<8x32xf32>
    %75 = arith.addf %73, %74 : vector<8x32xf32>
    %76 = math.tanh %75 : vector<8x32xf32>
    %77 = arith.mulf %72, %76 : vector<8x32xf32>
    %78 = arith.index_cast %12 : i32 to index
    %c0_20 = arith.constant 0 : index
    %79 = vector.load %arg4[%78, %c0_20] : memref<64x64xf32, #tpu.memory_space<vmem>>, vector<8x32xf32>
    tpu.vector_store %arg4[%78, %c0_20], %52 {strides = array<i32>} : memref<64x64xf32, #tpu.memory_space<vmem>>, vector<8x32xf32>,
    %80 = arith.index_cast %14 : i32 to index
    %c32 = arith.constant 32 : index
    %81 = vector.load %arg4[%80, %c32] : memref<64x64xf32, #tpu.memory_space<vmem>>, vector<8x32xf32>
    tpu.vector_store %arg4[%80, %c32], %77 {strides = array<i32>} : memref<64x64xf32, #tpu.memory_space<vmem>>, vector<8x32xf32>,
    %c1_i32 = arith.constant 1 : i32
    %c7_i32_21 = arith.constant 7 : i32
    %82 = arith.subi %c7_i32_21, %c1_i32 : i32
    %c8_i32_22 = arith.constant 8 : i32
    %83 = arith.muli %c1_i32, %c8_i32_22 : i32
    %84 = tpu.assume_multiple %83, 8 : i32
    %c8_i32_23 = arith.constant 8 : i32
    %85 = arith.muli %82, %c8_i32_23 : i32
    %86 = tpu.assume_multiple %85, 8 : i32
    %87 = arith.index_cast %84 : i32 to index
    %c0_24 = arith.constant 0 : index
    %88 = vector.load %arg5[%87, %c0_24] : memref<64x256xf32, #tpu.memory_space<vmem>>, vector<8x256xf32>
    %89 = arith.index_cast %86 : i32 to index
    %c0_25 = arith.constant 0 : index
    %90 = vector.load %arg5[%89, %c0_25] : memref<64x256xf32, #tpu.memory_space<vmem>>, vector<8x256xf32>
    %91 = tpu.concatenate %52, %77 in 1 : vector<8x32xf32>, vector<8x32xf32> -> vector<8x64xf32>
    %92 = arith.truncf %91 : vector<8x64xf32> to vector<8x64xbf16>
    %cst_26 = arith.constant dense<0.000000e+00> : vector<8x256xf32>
    %93 = tpu.matmul %92, %8, %cst_26 {dimension_numbers = #tpu.dot_dimension_numbers<[1], [0], [0], [1], [0, 0, 1, 1], [], []>} : vector<8x64xbf16>, vector<64x256xbf16>, vector<8x256xf32> -> vector<8x256xf32>
    %94 = vector.extract_strided_slice %88 {offsets = [0, 0], sizes = [8, 128], strides = [1, 1]} : vector<8x256xf32> to vector<8x128xf32>
    %95 = vector.extract_strided_slice %93 {offsets = [0, 0], sizes = [8, 128], strides = [1, 1]} : vector<8x256xf32> to vector<8x128xf32>
    %96 = arith.addf %94, %95 : vector<8x128xf32>
    %97 = vector.extract_strided_slice %90 {offsets = [0, 128], sizes = [8, 128], strides = [1, 1]} : vector<8x256xf32> to vector<8x128xf32>
    %98 = vector.extract_strided_slice %93 {offsets = [0, 128], sizes = [8, 128], strides = [1, 1]} : vector<8x256xf32> to vector<8x128xf32>
    %99 = arith.addf %97, %98 : vector<8x128xf32>
    %100 = vector.extract_strided_slice %96 {offsets = [0, 0], sizes = [8, 32], strides = [1, 1]} : vector<8x128xf32> to vector<8x32xf32>
    %101 = arith.negf %100 : vector<8x32xf32>
    %102 = math.exp %101 : vector<8x32xf32>
    %cst_27 = arith.constant 1.000000e+00 : f32
    %103 = vector.broadcast %cst_27 : f32 to vector<8x32xf32>
    %104 = arith.addf %103, %102 : vector<8x32xf32>
    %105 = arith.divf %103, %104 : vector<8x32xf32>
    %106 = vector.extract_strided_slice %96 {offsets = [0, 32], sizes = [8, 32], strides = [1, 1]} : vector<8x128xf32> to vector<8x32xf32>
    %107 = arith.negf %106 : vector<8x32xf32>
    %108 = math.exp %107 : vector<8x32xf32>
    %cst_28 = arith.constant 1.000000e+00 : f32
    %109 = vector.broadcast %cst_28 : f32 to vector<8x32xf32>
    %110 = arith.addf %109, %108 : vector<8x32xf32>
    %111 = arith.divf %109, %110 : vector<8x32xf32>
    %112 = vector.extract_strided_slice %96 {offsets = [0, 64], sizes = [8, 32], strides = [1, 1]} : vector<8x128xf32> to vector<8x32xf32>
    %113 = math.tanh %112 : vector<8x32xf32>
    %114 = vector.extract_strided_slice %96 {offsets = [0, 96], sizes = [8, 32], strides = [1, 1]} : vector<8x128xf32> to vector<8x32xf32>
    %115 = arith.negf %114 : vector<8x32xf32>
    %116 = math.exp %115 : vector<8x32xf32>
    %cst_29 = arith.constant 1.000000e+00 : f32
    %117 = vector.broadcast %cst_29 : f32 to vector<8x32xf32>
    %118 = arith.addf %117, %116 : vector<8x32xf32>
    %119 = arith.divf %117, %118 : vector<8x32xf32>
    %120 = arith.mulf %111, %50 : vector<8x32xf32>
    %121 = arith.mulf %105, %113 : vector<8x32xf32>
    %122 = arith.addf %120, %121 : vector<8x32xf32>
    %123 = math.tanh %122 : vector<8x32xf32>
    %124 = arith.mulf %119, %123 : vector<8x32xf32>
    %125 = vector.extract_strided_slice %99 {offsets = [0, 0], sizes = [8, 32], strides = [1, 1]} : vector<8x128xf32> to vector<8x32xf32>
    %126 = arith.negf %125 : vector<8x32xf32>
    %127 = math.exp %126 : vector<8x32xf32>
    %cst_30 = arith.constant 1.000000e+00 : f32
    %128 = vector.broadcast %cst_30 : f32 to vector<8x32xf32>
    %129 = arith.addf %128, %127 : vector<8x32xf32>
    %130 = arith.divf %128, %129 : vector<8x32xf32>
    %131 = vector.extract_strided_slice %99 {offsets = [0, 32], sizes = [8, 32], strides = [1, 1]} : vector<8x128xf32> to vector<8x32xf32>
    %132 = arith.negf %131 : vector<8x32xf32>
    %133 = math.exp %132 : vector<8x32xf32>
    %cst_31 = arith.constant 1.000000e+00 : f32
    %134 = vector.broadcast %cst_31 : f32 to vector<8x32xf32>
    %135 = arith.addf %134, %133 : vector<8x32xf32>
    %136 = arith.divf %134, %135 : vector<8x32xf32>
    %137 = vector.extract_strided_slice %99 {offsets = [0, 64], sizes = [8, 32], strides = [1, 1]} : vector<8x128xf32> to vector<8x32xf32>
    %138 = math.tanh %137 : vector<8x32xf32>
    %139 = vector.extract_strided_slice %99 {offsets = [0, 96], sizes = [8, 32], strides = [1, 1]} : vector<8x128xf32> to vector<8x32xf32>
    %140 = arith.negf %139 : vector<8x32xf32>
    %141 = math.exp %140 : vector<8x32xf32>
    %cst_32 = arith.constant 1.000000e+00 : f32
    %142 = vector.broadcast %cst_32 : f32 to vector<8x32xf32>
    %143 = arith.addf %142, %141 : vector<8x32xf32>
    %144 = arith.divf %142, %143 : vector<8x32xf32>
    %145 = arith.mulf %136, %75 : vector<8x32xf32>
    %146 = arith.mulf %130, %138 : vector<8x32xf32>
    %147 = arith.addf %145, %146 : vector<8x32xf32>
    %148 = math.tanh %147 : vector<8x32xf32>
    %149 = arith.mulf %144, %148 : vector<8x32xf32>
    %150 = arith.index_cast %84 : i32 to index
    %c0_33 = arith.constant 0 : index
    %151 = vector.load %arg4[%150, %c0_33] : memref<64x64xf32, #tpu.memory_space<vmem>>, vector<8x32xf32>
    tpu.vector_store %arg4[%150, %c0_33], %124 {strides = array<i32>} : memref<64x64xf32, #tpu.memory_space<vmem>>, vector<8x32xf32>,
    %152 = arith.index_cast %86 : i32 to index
    %c32_34 = arith.constant 32 : index
    %153 = vector.load %arg4[%152, %c32_34] : memref<64x64xf32, #tpu.memory_space<vmem>>, vector<8x32xf32>
    tpu.vector_store %arg4[%152, %c32_34], %149 {strides = array<i32>} : memref<64x64xf32, #tpu.memory_space<vmem>>, vector<8x32xf32>,
    %c2_i32 = arith.constant 2 : i32
    %c7_i32_35 = arith.constant 7 : i32
    %154 = arith.subi %c7_i32_35, %c2_i32 : i32
    %c8_i32_36 = arith.constant 8 : i32
    %155 = arith.muli %c2_i32, %c8_i32_36 : i32
    %156 = tpu.assume_multiple %155, 8 : i32
    %c8_i32_37 = arith.constant 8 : i32
    %157 = arith.muli %154, %c8_i32_37 : i32
    %158 = tpu.assume_multiple %157, 8 : i32
    %159 = arith.index_cast %156 : i32 to index
    %c0_38 = arith.constant 0 : index
    %160 = vector.load %arg5[%159, %c0_38] : memref<64x256xf32, #tpu.memory_space<vmem>>, vector<8x256xf32>
    %161 = arith.index_cast %158 : i32 to index
    %c0_39 = arith.constant 0 : index
    %162 = vector.load %arg5[%161, %c0_39] : memref<64x256xf32, #tpu.memory_space<vmem>>, vector<8x256xf32>
    %163 = tpu.concatenate %124, %149 in 1 : vector<8x32xf32>, vector<8x32xf32> -> vector<8x64xf32>
    %164 = arith.truncf %163 : vector<8x64xf32> to vector<8x64xbf16>
    %cst_40 = arith.constant dense<0.000000e+00> : vector<8x256xf32>
    %165 = tpu.matmul %164, %8, %cst_40 {dimension_numbers = #tpu.dot_dimension_numbers<[1], [0], [0], [1], [0, 0, 1, 1], [], []>} : vector<8x64xbf16>, vector<64x256xbf16>, vector<8x256xf32> -> vector<8x256xf32>
    %166 = vector.extract_strided_slice %160 {offsets = [0, 0], sizes = [8, 128], strides = [1, 1]} : vector<8x256xf32> to vector<8x128xf32>
    %167 = vector.extract_strided_slice %165 {offsets = [0, 0], sizes = [8, 128], strides = [1, 1]} : vector<8x256xf32> to vector<8x128xf32>
    %168 = arith.addf %166, %167 : vector<8x128xf32>
    %169 = vector.extract_strided_slice %162 {offsets = [0, 128], sizes = [8, 128], strides = [1, 1]} : vector<8x256xf32> to vector<8x128xf32>
    %170 = vector.extract_strided_slice %165 {offsets = [0, 128], sizes = [8, 128], strides = [1, 1]} : vector<8x256xf32> to vector<8x128xf32>
    %171 = arith.addf %169, %170 : vector<8x128xf32>
    %172 = vector.extract_strided_slice %168 {offsets = [0, 0], sizes = [8, 32], strides = [1, 1]} : vector<8x128xf32> to vector<8x32xf32>
    %173 = arith.negf %172 : vector<8x32xf32>
    %174 = math.exp %173 : vector<8x32xf32>
    %cst_41 = arith.constant 1.000000e+00 : f32
    %175 = vector.broadcast %cst_41 : f32 to vector<8x32xf32>
    %176 = arith.addf %175, %174 : vector<8x32xf32>
    %177 = arith.divf %175, %176 : vector<8x32xf32>
    %178 = vector.extract_strided_slice %168 {offsets = [0, 32], sizes = [8, 32], strides = [1, 1]} : vector<8x128xf32> to vector<8x32xf32>
    %179 = arith.negf %178 : vector<8x32xf32>
    %180 = math.exp %179 : vector<8x32xf32>
    %cst_42 = arith.constant 1.000000e+00 : f32
    %181 = vector.broadcast %cst_42 : f32 to vector<8x32xf32>
    %182 = arith.addf %181, %180 : vector<8x32xf32>
    %183 = arith.divf %181, %182 : vector<8x32xf32>
    %184 = vector.extract_strided_slice %168 {offsets = [0, 64], sizes = [8, 32], strides = [1, 1]} : vector<8x128xf32> to vector<8x32xf32>
    %185 = math.tanh %184 : vector<8x32xf32>
    %186 = vector.extract_strided_slice %168 {offsets = [0, 96], sizes = [8, 32], strides = [1, 1]} : vector<8x128xf32> to vector<8x32xf32>
    %187 = arith.negf %186 : vector<8x32xf32>
    %188 = math.exp %187 : vector<8x32xf32>
    %cst_43 = arith.constant 1.000000e+00 : f32
    %189 = vector.broadcast %cst_43 : f32 to vector<8x32xf32>
    %190 = arith.addf %189, %188 : vector<8x32xf32>
    %191 = arith.divf %189, %190 : vector<8x32xf32>
    %192 = arith.mulf %183, %122 : vector<8x32xf32>
    %193 = arith.mulf %177, %185 : vector<8x32xf32>
    %194 = arith.addf %192, %193 : vector<8x32xf32>
    %195 = math.tanh %194 : vector<8x32xf32>
    %196 = arith.mulf %191, %195 : vector<8x32xf32>
    %197 = vector.extract_strided_slice %171 {offsets = [0, 0], sizes = [8, 32], strides = [1, 1]} : vector<8x128xf32> to vector<8x32xf32>
    %198 = arith.negf %197 : vector<8x32xf32>
    %199 = math.exp %198 : vector<8x32xf32>
    %cst_44 = arith.constant 1.000000e+00 : f32
    %200 = vector.broadcast %cst_44 : f32 to vector<8x32xf32>
    %201 = arith.addf %200, %199 : vector<8x32xf32>
    %202 = arith.divf %200, %201 : vector<8x32xf32>
    %203 = vector.extract_strided_slice %171 {offsets = [0, 32], sizes = [8, 32], strides = [1, 1]} : vector<8x128xf32> to vector<8x32xf32>
    %204 = arith.negf %203 : vector<8x32xf32>
    %205 = math.exp %204 : vector<8x32xf32>
    %cst_45 = arith.constant 1.000000e+00 : f32
    %206 = vector.broadcast %cst_45 : f32 to vector<8x32xf32>
    %207 = arith.addf %206, %205 : vector<8x32xf32>
    %208 = arith.divf %206, %207 : vector<8x32xf32>
    %209 = vector.extract_strided_slice %171 {offsets = [0, 64], sizes = [8, 32], strides = [1, 1]} : vector<8x128xf32> to vector<8x32xf32>
    %210 = math.tanh %209 : vector<8x32xf32>
    %211 = vector.extract_strided_slice %171 {offsets = [0, 96], sizes = [8, 32], strides = [1, 1]} : vector<8x128xf32> to vector<8x32xf32>
    %212 = arith.negf %211 : vector<8x32xf32>
    %213 = math.exp %212 : vector<8x32xf32>
    %cst_46 = arith.constant 1.000000e+00 : f32
    %214 = vector.broadcast %cst_46 : f32 to vector<8x32xf32>
    %215 = arith.addf %214, %213 : vector<8x32xf32>
    %216 = arith.divf %214, %215 : vector<8x32xf32>
    %217 = arith.mulf %208, %147 : vector<8x32xf32>
    %218 = arith.mulf %202, %210 : vector<8x32xf32>
    %219 = arith.addf %217, %218 : vector<8x32xf32>
    %220 = math.tanh %219 : vector<8x32xf32>
    %221 = arith.mulf %216, %220 : vector<8x32xf32>
    %222 = arith.index_cast %156 : i32 to index
    %c0_47 = arith.constant 0 : index
    %223 = vector.load %arg4[%222, %c0_47] : memref<64x64xf32, #tpu.memory_space<vmem>>, vector<8x32xf32>
    tpu.vector_store %arg4[%222, %c0_47], %196 {strides = array<i32>} : memref<64x64xf32, #tpu.memory_space<vmem>>, vector<8x32xf32>,
    %224 = arith.index_cast %158 : i32 to index
    %c32_48 = arith.constant 32 : index
    %225 = vector.load %arg4[%224, %c32_48] : memref<64x64xf32, #tpu.memory_space<vmem>>, vector<8x32xf32>
    tpu.vector_store %arg4[%224, %c32_48], %221 {strides = array<i32>} : memref<64x64xf32, #tpu.memory_space<vmem>>, vector<8x32xf32>,
    %c3_i32 = arith.constant 3 : i32
    %c7_i32_49 = arith.constant 7 : i32
    %226 = arith.subi %c7_i32_49, %c3_i32 : i32
    %c8_i32_50 = arith.constant 8 : i32
    %227 = arith.muli %c3_i32, %c8_i32_50 : i32
    %228 = tpu.assume_multiple %227, 8 : i32
    %c8_i32_51 = arith.constant 8 : i32
    %229 = arith.muli %226, %c8_i32_51 : i32
    %230 = tpu.assume_multiple %229, 8 : i32
    %231 = arith.index_cast %228 : i32 to index
    %c0_52 = arith.constant 0 : index
    %232 = vector.load %arg5[%231, %c0_52] : memref<64x256xf32, #tpu.memory_space<vmem>>, vector<8x256xf32>
    %233 = arith.index_cast %230 : i32 to index
    %c0_53 = arith.constant 0 : index
    %234 = vector.load %arg5[%233, %c0_53] : memref<64x256xf32, #tpu.memory_space<vmem>>, vector<8x256xf32>
    %235 = tpu.concatenate %196, %221 in 1 : vector<8x32xf32>, vector<8x32xf32> -> vector<8x64xf32>
    %236 = arith.truncf %235 : vector<8x64xf32> to vector<8x64xbf16>
    %cst_54 = arith.constant dense<0.000000e+00> : vector<8x256xf32>
    %237 = tpu.matmul %236, %8, %cst_54 {dimension_numbers = #tpu.dot_dimension_numbers<[1], [0], [0], [1], [0, 0, 1, 1], [], []>} : vector<8x64xbf16>, vector<64x256xbf16>, vector<8x256xf32> -> vector<8x256xf32>
    %238 = vector.extract_strided_slice %232 {offsets = [0, 0], sizes = [8, 128], strides = [1, 1]} : vector<8x256xf32> to vector<8x128xf32>
    %239 = vector.extract_strided_slice %237 {offsets = [0, 0], sizes = [8, 128], strides = [1, 1]} : vector<8x256xf32> to vector<8x128xf32>
    %240 = arith.addf %238, %239 : vector<8x128xf32>
    %241 = vector.extract_strided_slice %234 {offsets = [0, 128], sizes = [8, 128], strides = [1, 1]} : vector<8x256xf32> to vector<8x128xf32>
    %242 = vector.extract_strided_slice %237 {offsets = [0, 128], sizes = [8, 128], strides = [1, 1]} : vector<8x256xf32> to vector<8x128xf32>
    %243 = arith.addf %241, %242 : vector<8x128xf32>
    %244 = vector.extract_strided_slice %240 {offsets = [0, 0], sizes = [8, 32], strides = [1, 1]} : vector<8x128xf32> to vector<8x32xf32>
    %245 = arith.negf %244 : vector<8x32xf32>
    %246 = math.exp %245 : vector<8x32xf32>
    %cst_55 = arith.constant 1.000000e+00 : f32
    %247 = vector.broadcast %cst_55 : f32 to vector<8x32xf32>
    %248 = arith.addf %247, %246 : vector<8x32xf32>
    %249 = arith.divf %247, %248 : vector<8x32xf32>
    %250 = vector.extract_strided_slice %240 {offsets = [0, 32], sizes = [8, 32], strides = [1, 1]} : vector<8x128xf32> to vector<8x32xf32>
    %251 = arith.negf %250 : vector<8x32xf32>
    %252 = math.exp %251 : vector<8x32xf32>
    %cst_56 = arith.constant 1.000000e+00 : f32
    %253 = vector.broadcast %cst_56 : f32 to vector<8x32xf32>
    %254 = arith.addf %253, %252 : vector<8x32xf32>
    %255 = arith.divf %253, %254 : vector<8x32xf32>
    %256 = vector.extract_strided_slice %240 {offsets = [0, 64], sizes = [8, 32], strides = [1, 1]} : vector<8x128xf32> to vector<8x32xf32>
    %257 = math.tanh %256 : vector<8x32xf32>
    %258 = vector.extract_strided_slice %240 {offsets = [0, 96], sizes = [8, 32], strides = [1, 1]} : vector<8x128xf32> to vector<8x32xf32>
    %259 = arith.negf %258 : vector<8x32xf32>
    %260 = math.exp %259 : vector<8x32xf32>
    %cst_57 = arith.constant 1.000000e+00 : f32
    %261 = vector.broadcast %cst_57 : f32 to vector<8x32xf32>
    %262 = arith.addf %261, %260 : vector<8x32xf32>
    %263 = arith.divf %261, %262 : vector<8x32xf32>
    %264 = arith.mulf %255, %194 : vector<8x32xf32>
    %265 = arith.mulf %249, %257 : vector<8x32xf32>
    %266 = arith.addf %264, %265 : vector<8x32xf32>
    %267 = math.tanh %266 : vector<8x32xf32>
    %268 = arith.mulf %263, %267 : vector<8x32xf32>
    %269 = vector.extract_strided_slice %243 {offsets = [0, 0], sizes = [8, 32], strides = [1, 1]} : vector<8x128xf32> to vector<8x32xf32>
    %270 = arith.negf %269 : vector<8x32xf32>
    %271 = math.exp %270 : vector<8x32xf32>
    %cst_58 = arith.constant 1.000000e+00 : f32
    %272 = vector.broadcast %cst_58 : f32 to vector<8x32xf32>
    %273 = arith.addf %272, %271 : vector<8x32xf32>
    %274 = arith.divf %272, %273 : vector<8x32xf32>
    %275 = vector.extract_strided_slice %243 {offsets = [0, 32], sizes = [8, 32], strides = [1, 1]} : vector<8x128xf32> to vector<8x32xf32>
    %276 = arith.negf %275 : vector<8x32xf32>
    %277 = math.exp %276 : vector<8x32xf32>
    %cst_59 = arith.constant 1.000000e+00 : f32
    %278 = vector.broadcast %cst_59 : f32 to vector<8x32xf32>
    %279 = arith.addf %278, %277 : vector<8x32xf32>
    %280 = arith.divf %278, %279 : vector<8x32xf32>
    %281 = vector.extract_strided_slice %243 {offsets = [0, 64], sizes = [8, 32], strides = [1, 1]} : vector<8x128xf32> to vector<8x32xf32>
    %282 = math.tanh %281 : vector<8x32xf32>
    %283 = vector.extract_strided_slice %243 {offsets = [0, 96], sizes = [8, 32], strides = [1, 1]} : vector<8x128xf32> to vector<8x32xf32>
    %284 = arith.negf %283 : vector<8x32xf32>
    %285 = math.exp %284 : vector<8x32xf32>
    %cst_60 = arith.constant 1.000000e+00 : f32
    %286 = vector.broadcast %cst_60 : f32 to vector<8x32xf32>
    %287 = arith.addf %286, %285 : vector<8x32xf32>
    %288 = arith.divf %286, %287 : vector<8x32xf32>
    %289 = arith.mulf %280, %219 : vector<8x32xf32>
    %290 = arith.mulf %274, %282 : vector<8x32xf32>
    %291 = arith.addf %289, %290 : vector<8x32xf32>
    %292 = math.tanh %291 : vector<8x32xf32>
    %293 = arith.mulf %288, %292 : vector<8x32xf32>
    %294 = arith.index_cast %228 : i32 to index
    %c0_61 = arith.constant 0 : index
    %295 = vector.load %arg4[%294, %c0_61] : memref<64x64xf32, #tpu.memory_space<vmem>>, vector<8x32xf32>
    tpu.vector_store %arg4[%294, %c0_61], %268 {strides = array<i32>} : memref<64x64xf32, #tpu.memory_space<vmem>>, vector<8x32xf32>,
    %296 = arith.index_cast %230 : i32 to index
    %c32_62 = arith.constant 32 : index
    %297 = vector.load %arg4[%296, %c32_62] : memref<64x64xf32, #tpu.memory_space<vmem>>, vector<8x32xf32>
    tpu.vector_store %arg4[%296, %c32_62], %293 {strides = array<i32>} : memref<64x64xf32, #tpu.memory_space<vmem>>, vector<8x32xf32>,
    %c4_i32 = arith.constant 4 : i32
    %c7_i32_63 = arith.constant 7 : i32
    %298 = arith.subi %c7_i32_63, %c4_i32 : i32
    %c8_i32_64 = arith.constant 8 : i32
    %299 = arith.muli %c4_i32, %c8_i32_64 : i32
    %300 = tpu.assume_multiple %299, 8 : i32
    %c8_i32_65 = arith.constant 8 : i32
    %301 = arith.muli %298, %c8_i32_65 : i32
    %302 = tpu.assume_multiple %301, 8 : i32
    %303 = arith.index_cast %300 : i32 to index
    %c0_66 = arith.constant 0 : index
    %304 = vector.load %arg5[%303, %c0_66] : memref<64x256xf32, #tpu.memory_space<vmem>>, vector<8x256xf32>
    %305 = arith.index_cast %302 : i32 to index
    %c0_67 = arith.constant 0 : index
    %306 = vector.load %arg5[%305, %c0_67] : memref<64x256xf32, #tpu.memory_space<vmem>>, vector<8x256xf32>
    %307 = tpu.concatenate %268, %293 in 1 : vector<8x32xf32>, vector<8x32xf32> -> vector<8x64xf32>
    %308 = arith.truncf %307 : vector<8x64xf32> to vector<8x64xbf16>
    %cst_68 = arith.constant dense<0.000000e+00> : vector<8x256xf32>
    %309 = tpu.matmul %308, %8, %cst_68 {dimension_numbers = #tpu.dot_dimension_numbers<[1], [0], [0], [1], [0, 0, 1, 1], [], []>} : vector<8x64xbf16>, vector<64x256xbf16>, vector<8x256xf32> -> vector<8x256xf32>
    %310 = vector.extract_strided_slice %304 {offsets = [0, 0], sizes = [8, 128], strides = [1, 1]} : vector<8x256xf32> to vector<8x128xf32>
    %311 = vector.extract_strided_slice %309 {offsets = [0, 0], sizes = [8, 128], strides = [1, 1]} : vector<8x256xf32> to vector<8x128xf32>
    %312 = arith.addf %310, %311 : vector<8x128xf32>
    %313 = vector.extract_strided_slice %306 {offsets = [0, 128], sizes = [8, 128], strides = [1, 1]} : vector<8x256xf32> to vector<8x128xf32>
    %314 = vector.extract_strided_slice %309 {offsets = [0, 128], sizes = [8, 128], strides = [1, 1]} : vector<8x256xf32> to vector<8x128xf32>
    %315 = arith.addf %313, %314 : vector<8x128xf32>
    %316 = vector.extract_strided_slice %312 {offsets = [0, 0], sizes = [8, 32], strides = [1, 1]} : vector<8x128xf32> to vector<8x32xf32>
    %317 = arith.negf %316 : vector<8x32xf32>
    %318 = math.exp %317 : vector<8x32xf32>
    %cst_69 = arith.constant 1.000000e+00 : f32
    %319 = vector.broadcast %cst_69 : f32 to vector<8x32xf32>
    %320 = arith.addf %319, %318 : vector<8x32xf32>
    %321 = arith.divf %319, %320 : vector<8x32xf32>
    %322 = vector.extract_strided_slice %312 {offsets = [0, 32], sizes = [8, 32], strides = [1, 1]} : vector<8x128xf32> to vector<8x32xf32>
    %323 = arith.negf %322 : vector<8x32xf32>
    %324 = math.exp %323 : vector<8x32xf32>
    %cst_70 = arith.constant 1.000000e+00 : f32
    %325 = vector.broadcast %cst_70 : f32 to vector<8x32xf32>
    %326 = arith.addf %325, %324 : vector<8x32xf32>
    %327 = arith.divf %325, %326 : vector<8x32xf32>
    %328 = vector.extract_strided_slice %312 {offsets = [0, 64], sizes = [8, 32], strides = [1, 1]} : vector<8x128xf32> to vector<8x32xf32>
    %329 = math.tanh %328 : vector<8x32xf32>
    %330 = vector.extract_strided_slice %312 {offsets = [0, 96], sizes = [8, 32], strides = [1, 1]} : vector<8x128xf32> to vector<8x32xf32>
    %331 = arith.negf %330 : vector<8x32xf32>
    %332 = math.exp %331 : vector<8x32xf32>
    %cst_71 = arith.constant 1.000000e+00 : f32
    %333 = vector.broadcast %cst_71 : f32 to vector<8x32xf32>
    %334 = arith.addf %333, %332 : vector<8x32xf32>
    %335 = arith.divf %333, %334 : vector<8x32xf32>
    %336 = arith.mulf %327, %266 : vector<8x32xf32>
    %337 = arith.mulf %321, %329 : vector<8x32xf32>
    %338 = arith.addf %336, %337 : vector<8x32xf32>
    %339 = math.tanh %338 : vector<8x32xf32>
    %340 = arith.mulf %335, %339 : vector<8x32xf32>
    %341 = vector.extract_strided_slice %315 {offsets = [0, 0], sizes = [8, 32], strides = [1, 1]} : vector<8x128xf32> to vector<8x32xf32>
    %342 = arith.negf %341 : vector<8x32xf32>
    %343 = math.exp %342 : vector<8x32xf32>
    %cst_72 = arith.constant 1.000000e+00 : f32
    %344 = vector.broadcast %cst_72 : f32 to vector<8x32xf32>
    %345 = arith.addf %344, %343 : vector<8x32xf32>
    %346 = arith.divf %344, %345 : vector<8x32xf32>
    %347 = vector.extract_strided_slice %315 {offsets = [0, 32], sizes = [8, 32], strides = [1, 1]} : vector<8x128xf32> to vector<8x32xf32>
    %348 = arith.negf %347 : vector<8x32xf32>
    %349 = math.exp %348 : vector<8x32xf32>
    %cst_73 = arith.constant 1.000000e+00 : f32
    %350 = vector.broadcast %cst_73 : f32 to vector<8x32xf32>
    %351 = arith.addf %350, %349 : vector<8x32xf32>
    %352 = arith.divf %350, %351 : vector<8x32xf32>
    %353 = vector.extract_strided_slice %315 {offsets = [0, 64], sizes = [8, 32], strides = [1, 1]} : vector<8x128xf32> to vector<8x32xf32>
    %354 = math.tanh %353 : vector<8x32xf32>
    %355 = vector.extract_strided_slice %315 {offsets = [0, 96], sizes = [8, 32], strides = [1, 1]} : vector<8x128xf32> to vector<8x32xf32>
    %356 = arith.negf %355 : vector<8x32xf32>
    %357 = math.exp %356 : vector<8x32xf32>
    %cst_74 = arith.constant 1.000000e+00 : f32
    %358 = vector.broadcast %cst_74 : f32 to vector<8x32xf32>
    %359 = arith.addf %358, %357 : vector<8x32xf32>
    %360 = arith.divf %358, %359 : vector<8x32xf32>
    %361 = arith.mulf %352, %291 : vector<8x32xf32>
    %362 = arith.mulf %346, %354 : vector<8x32xf32>
    %363 = arith.addf %361, %362 : vector<8x32xf32>
    %364 = math.tanh %363 : vector<8x32xf32>
    %365 = arith.mulf %360, %364 : vector<8x32xf32>
    %366 = arith.index_cast %300 : i32 to index
    %c0_75 = arith.constant 0 : index
    %367 = vector.load %arg4[%366, %c0_75] : memref<64x64xf32, #tpu.memory_space<vmem>>, vector<8x32xf32>
    tpu.vector_store %arg4[%366, %c0_75], %340 {strides = array<i32>} : memref<64x64xf32, #tpu.memory_space<vmem>>, vector<8x32xf32>,
    %368 = arith.index_cast %302 : i32 to index
    %c32_76 = arith.constant 32 : index
    %369 = vector.load %arg4[%368, %c32_76] : memref<64x64xf32, #tpu.memory_space<vmem>>, vector<8x32xf32>
    tpu.vector_store %arg4[%368, %c32_76], %365 {strides = array<i32>} : memref<64x64xf32, #tpu.memory_space<vmem>>, vector<8x32xf32>,
    %c5_i32 = arith.constant 5 : i32
    %c7_i32_77 = arith.constant 7 : i32
    %370 = arith.subi %c7_i32_77, %c5_i32 : i32
    %c8_i32_78 = arith.constant 8 : i32
    %371 = arith.muli %c5_i32, %c8_i32_78 : i32
    %372 = tpu.assume_multiple %371, 8 : i32
    %c8_i32_79 = arith.constant 8 : i32
    %373 = arith.muli %370, %c8_i32_79 : i32
    %374 = tpu.assume_multiple %373, 8 : i32
    %375 = arith.index_cast %372 : i32 to index
    %c0_80 = arith.constant 0 : index
    %376 = vector.load %arg5[%375, %c0_80] : memref<64x256xf32, #tpu.memory_space<vmem>>, vector<8x256xf32>
    %377 = arith.index_cast %374 : i32 to index
    %c0_81 = arith.constant 0 : index
    %378 = vector.load %arg5[%377, %c0_81] : memref<64x256xf32, #tpu.memory_space<vmem>>, vector<8x256xf32>
    %379 = tpu.concatenate %340, %365 in 1 : vector<8x32xf32>, vector<8x32xf32> -> vector<8x64xf32>
    %380 = arith.truncf %379 : vector<8x64xf32> to vector<8x64xbf16>
    %cst_82 = arith.constant dense<0.000000e+00> : vector<8x256xf32>
    %381 = tpu.matmul %380, %8, %cst_82 {dimension_numbers = #tpu.dot_dimension_numbers<[1], [0], [0], [1], [0, 0, 1, 1], [], []>} : vector<8x64xbf16>, vector<64x256xbf16>, vector<8x256xf32> -> vector<8x256xf32>
    %382 = vector.extract_strided_slice %376 {offsets = [0, 0], sizes = [8, 128], strides = [1, 1]} : vector<8x256xf32> to vector<8x128xf32>
    %383 = vector.extract_strided_slice %381 {offsets = [0, 0], sizes = [8, 128], strides = [1, 1]} : vector<8x256xf32> to vector<8x128xf32>
    %384 = arith.addf %382, %383 : vector<8x128xf32>
    %385 = vector.extract_strided_slice %378 {offsets = [0, 128], sizes = [8, 128], strides = [1, 1]} : vector<8x256xf32> to vector<8x128xf32>
    %386 = vector.extract_strided_slice %381 {offsets = [0, 128], sizes = [8, 128], strides = [1, 1]} : vector<8x256xf32> to vector<8x128xf32>
    %387 = arith.addf %385, %386 : vector<8x128xf32>
    %388 = vector.extract_strided_slice %384 {offsets = [0, 0], sizes = [8, 32], strides = [1, 1]} : vector<8x128xf32> to vector<8x32xf32>
    %389 = arith.negf %388 : vector<8x32xf32>
    %390 = math.exp %389 : vector<8x32xf32>
    %cst_83 = arith.constant 1.000000e+00 : f32
    %391 = vector.broadcast %cst_83 : f32 to vector<8x32xf32>
    %392 = arith.addf %391, %390 : vector<8x32xf32>
    %393 = arith.divf %391, %392 : vector<8x32xf32>
    %394 = vector.extract_strided_slice %384 {offsets = [0, 32], sizes = [8, 32], strides = [1, 1]} : vector<8x128xf32> to vector<8x32xf32>
    %395 = arith.negf %394 : vector<8x32xf32>
    %396 = math.exp %395 : vector<8x32xf32>
    %cst_84 = arith.constant 1.000000e+00 : f32
    %397 = vector.broadcast %cst_84 : f32 to vector<8x32xf32>
    %398 = arith.addf %397, %396 : vector<8x32xf32>
    %399 = arith.divf %397, %398 : vector<8x32xf32>
    %400 = vector.extract_strided_slice %384 {offsets = [0, 64], sizes = [8, 32], strides = [1, 1]} : vector<8x128xf32> to vector<8x32xf32>
    %401 = math.tanh %400 : vector<8x32xf32>
    %402 = vector.extract_strided_slice %384 {offsets = [0, 96], sizes = [8, 32], strides = [1, 1]} : vector<8x128xf32> to vector<8x32xf32>
    %403 = arith.negf %402 : vector<8x32xf32>
    %404 = math.exp %403 : vector<8x32xf32>
    %cst_85 = arith.constant 1.000000e+00 : f32
    %405 = vector.broadcast %cst_85 : f32 to vector<8x32xf32>
    %406 = arith.addf %405, %404 : vector<8x32xf32>
    %407 = arith.divf %405, %406 : vector<8x32xf32>
    %408 = arith.mulf %399, %338 : vector<8x32xf32>
    %409 = arith.mulf %393, %401 : vector<8x32xf32>
    %410 = arith.addf %408, %409 : vector<8x32xf32>
    %411 = math.tanh %410 : vector<8x32xf32>
    %412 = arith.mulf %407, %411 : vector<8x32xf32>
    %413 = vector.extract_strided_slice %387 {offsets = [0, 0], sizes = [8, 32], strides = [1, 1]} : vector<8x128xf32> to vector<8x32xf32>
    %414 = arith.negf %413 : vector<8x32xf32>
    %415 = math.exp %414 : vector<8x32xf32>
    %cst_86 = arith.constant 1.000000e+00 : f32
    %416 = vector.broadcast %cst_86 : f32 to vector<8x32xf32>
    %417 = arith.addf %416, %415 : vector<8x32xf32>
    %418 = arith.divf %416, %417 : vector<8x32xf32>
    %419 = vector.extract_strided_slice %387 {offsets = [0, 32], sizes = [8, 32], strides = [1, 1]} : vector<8x128xf32> to vector<8x32xf32>
    %420 = arith.negf %419 : vector<8x32xf32>
    %421 = math.exp %420 : vector<8x32xf32>
    %cst_87 = arith.constant 1.000000e+00 : f32
    %422 = vector.broadcast %cst_87 : f32 to vector<8x32xf32>
    %423 = arith.addf %422, %421 : vector<8x32xf32>
    %424 = arith.divf %422, %423 : vector<8x32xf32>
    %425 = vector.extract_strided_slice %387 {offsets = [0, 64], sizes = [8, 32], strides = [1, 1]} : vector<8x128xf32> to vector<8x32xf32>
    %426 = math.tanh %425 : vector<8x32xf32>
    %427 = vector.extract_strided_slice %387 {offsets = [0, 96], sizes = [8, 32], strides = [1, 1]} : vector<8x128xf32> to vector<8x32xf32>
    %428 = arith.negf %427 : vector<8x32xf32>
    %429 = math.exp %428 : vector<8x32xf32>
    %cst_88 = arith.constant 1.000000e+00 : f32
    %430 = vector.broadcast %cst_88 : f32 to vector<8x32xf32>
    %431 = arith.addf %430, %429 : vector<8x32xf32>
    %432 = arith.divf %430, %431 : vector<8x32xf32>
    %433 = arith.mulf %424, %363 : vector<8x32xf32>
    %434 = arith.mulf %418, %426 : vector<8x32xf32>
    %435 = arith.addf %433, %434 : vector<8x32xf32>
    %436 = math.tanh %435 : vector<8x32xf32>
    %437 = arith.mulf %432, %436 : vector<8x32xf32>
    %438 = arith.index_cast %372 : i32 to index
    %c0_89 = arith.constant 0 : index
    %439 = vector.load %arg4[%438, %c0_89] : memref<64x64xf32, #tpu.memory_space<vmem>>, vector<8x32xf32>
    tpu.vector_store %arg4[%438, %c0_89], %412 {strides = array<i32>} : memref<64x64xf32, #tpu.memory_space<vmem>>, vector<8x32xf32>,
    %440 = arith.index_cast %374 : i32 to index
    %c32_90 = arith.constant 32 : index
    %441 = vector.load %arg4[%440, %c32_90] : memref<64x64xf32, #tpu.memory_space<vmem>>, vector<8x32xf32>
    tpu.vector_store %arg4[%440, %c32_90], %437 {strides = array<i32>} : memref<64x64xf32, #tpu.memory_space<vmem>>, vector<8x32xf32>,
    %c6_i32 = arith.constant 6 : i32
    %c7_i32_91 = arith.constant 7 : i32
    %442 = arith.subi %c7_i32_91, %c6_i32 : i32
    %c8_i32_92 = arith.constant 8 : i32
    %443 = arith.muli %c6_i32, %c8_i32_92 : i32
    %444 = tpu.assume_multiple %443, 8 : i32
    %c8_i32_93 = arith.constant 8 : i32
    %445 = arith.muli %442, %c8_i32_93 : i32
    %446 = tpu.assume_multiple %445, 8 : i32
    %447 = arith.index_cast %444 : i32 to index
    %c0_94 = arith.constant 0 : index
    %448 = vector.load %arg5[%447, %c0_94] : memref<64x256xf32, #tpu.memory_space<vmem>>, vector<8x256xf32>
    %449 = arith.index_cast %446 : i32 to index
    %c0_95 = arith.constant 0 : index
    %450 = vector.load %arg5[%449, %c0_95] : memref<64x256xf32, #tpu.memory_space<vmem>>, vector<8x256xf32>
    %451 = tpu.concatenate %412, %437 in 1 : vector<8x32xf32>, vector<8x32xf32> -> vector<8x64xf32>
    %452 = arith.truncf %451 : vector<8x64xf32> to vector<8x64xbf16>
    %cst_96 = arith.constant dense<0.000000e+00> : vector<8x256xf32>
    %453 = tpu.matmul %452, %8, %cst_96 {dimension_numbers = #tpu.dot_dimension_numbers<[1], [0], [0], [1], [0, 0, 1, 1], [], []>} : vector<8x64xbf16>, vector<64x256xbf16>, vector<8x256xf32> -> vector<8x256xf32>
    %454 = vector.extract_strided_slice %448 {offsets = [0, 0], sizes = [8, 128], strides = [1, 1]} : vector<8x256xf32> to vector<8x128xf32>
    %455 = vector.extract_strided_slice %453 {offsets = [0, 0], sizes = [8, 128], strides = [1, 1]} : vector<8x256xf32> to vector<8x128xf32>
    %456 = arith.addf %454, %455 : vector<8x128xf32>
    %457 = vector.extract_strided_slice %450 {offsets = [0, 128], sizes = [8, 128], strides = [1, 1]} : vector<8x256xf32> to vector<8x128xf32>
    %458 = vector.extract_strided_slice %453 {offsets = [0, 128], sizes = [8, 128], strides = [1, 1]} : vector<8x256xf32> to vector<8x128xf32>
    %459 = arith.addf %457, %458 : vector<8x128xf32>
    %460 = vector.extract_strided_slice %456 {offsets = [0, 0], sizes = [8, 32], strides = [1, 1]} : vector<8x128xf32> to vector<8x32xf32>
    %461 = arith.negf %460 : vector<8x32xf32>
    %462 = math.exp %461 : vector<8x32xf32>
    %cst_97 = arith.constant 1.000000e+00 : f32
    %463 = vector.broadcast %cst_97 : f32 to vector<8x32xf32>
    %464 = arith.addf %463, %462 : vector<8x32xf32>
    %465 = arith.divf %463, %464 : vector<8x32xf32>
    %466 = vector.extract_strided_slice %456 {offsets = [0, 32], sizes = [8, 32], strides = [1, 1]} : vector<8x128xf32> to vector<8x32xf32>
    %467 = arith.negf %466 : vector<8x32xf32>
    %468 = math.exp %467 : vector<8x32xf32>
    %cst_98 = arith.constant 1.000000e+00 : f32
    %469 = vector.broadcast %cst_98 : f32 to vector<8x32xf32>
    %470 = arith.addf %469, %468 : vector<8x32xf32>
    %471 = arith.divf %469, %470 : vector<8x32xf32>
    %472 = vector.extract_strided_slice %456 {offsets = [0, 64], sizes = [8, 32], strides = [1, 1]} : vector<8x128xf32> to vector<8x32xf32>
    %473 = math.tanh %472 : vector<8x32xf32>
    %474 = vector.extract_strided_slice %456 {offsets = [0, 96], sizes = [8, 32], strides = [1, 1]} : vector<8x128xf32> to vector<8x32xf32>
    %475 = arith.negf %474 : vector<8x32xf32>
    %476 = math.exp %475 : vector<8x32xf32>
    %cst_99 = arith.constant 1.000000e+00 : f32
    %477 = vector.broadcast %cst_99 : f32 to vector<8x32xf32>
    %478 = arith.addf %477, %476 : vector<8x32xf32>
    %479 = arith.divf %477, %478 : vector<8x32xf32>
    %480 = arith.mulf %471, %410 : vector<8x32xf32>
    %481 = arith.mulf %465, %473 : vector<8x32xf32>
    %482 = arith.addf %480, %481 : vector<8x32xf32>
    %483 = math.tanh %482 : vector<8x32xf32>
    %484 = arith.mulf %479, %483 : vector<8x32xf32>
    %485 = vector.extract_strided_slice %459 {offsets = [0, 0], sizes = [8, 32], strides = [1, 1]} : vector<8x128xf32> to vector<8x32xf32>
    %486 = arith.negf %485 : vector<8x32xf32>
    %487 = math.exp %486 : vector<8x32xf32>
    %cst_100 = arith.constant 1.000000e+00 : f32
    %488 = vector.broadcast %cst_100 : f32 to vector<8x32xf32>
    %489 = arith.addf %488, %487 : vector<8x32xf32>
    %490 = arith.divf %488, %489 : vector<8x32xf32>
    %491 = vector.extract_strided_slice %459 {offsets = [0, 32], sizes = [8, 32], strides = [1, 1]} : vector<8x128xf32> to vector<8x32xf32>
    %492 = arith.negf %491 : vector<8x32xf32>
    %493 = math.exp %492 : vector<8x32xf32>
    %cst_101 = arith.constant 1.000000e+00 : f32
    %494 = vector.broadcast %cst_101 : f32 to vector<8x32xf32>
    %495 = arith.addf %494, %493 : vector<8x32xf32>
    %496 = arith.divf %494, %495 : vector<8x32xf32>
    %497 = vector.extract_strided_slice %459 {offsets = [0, 64], sizes = [8, 32], strides = [1, 1]} : vector<8x128xf32> to vector<8x32xf32>
    %498 = math.tanh %497 : vector<8x32xf32>
    %499 = vector.extract_strided_slice %459 {offsets = [0, 96], sizes = [8, 32], strides = [1, 1]} : vector<8x128xf32> to vector<8x32xf32>
    %500 = arith.negf %499 : vector<8x32xf32>
    %501 = math.exp %500 : vector<8x32xf32>
    %cst_102 = arith.constant 1.000000e+00 : f32
    %502 = vector.broadcast %cst_102 : f32 to vector<8x32xf32>
    %503 = arith.addf %502, %501 : vector<8x32xf32>
    %504 = arith.divf %502, %503 : vector<8x32xf32>
    %505 = arith.mulf %496, %435 : vector<8x32xf32>
    %506 = arith.mulf %490, %498 : vector<8x32xf32>
    %507 = arith.addf %505, %506 : vector<8x32xf32>
    %508 = math.tanh %507 : vector<8x32xf32>
    %509 = arith.mulf %504, %508 : vector<8x32xf32>
    %510 = arith.index_cast %444 : i32 to index
    %c0_103 = arith.constant 0 : index
    %511 = vector.load %arg4[%510, %c0_103] : memref<64x64xf32, #tpu.memory_space<vmem>>, vector<8x32xf32>
    tpu.vector_store %arg4[%510, %c0_103], %484 {strides = array<i32>} : memref<64x64xf32, #tpu.memory_space<vmem>>, vector<8x32xf32>,
    %512 = arith.index_cast %446 : i32 to index
    %c32_104 = arith.constant 32 : index
    %513 = vector.load %arg4[%512, %c32_104] : memref<64x64xf32, #tpu.memory_space<vmem>>, vector<8x32xf32>
    tpu.vector_store %arg4[%512, %c32_104], %509 {strides = array<i32>} : memref<64x64xf32, #tpu.memory_space<vmem>>, vector<8x32xf32>,
    %c7_i32_105 = arith.constant 7 : i32
    %c7_i32_106 = arith.constant 7 : i32
    %514 = arith.subi %c7_i32_106, %c7_i32_105 : i32
    %c8_i32_107 = arith.constant 8 : i32
    %515 = arith.muli %c7_i32_105, %c8_i32_107 : i32
    %516 = tpu.assume_multiple %515, 8 : i32
    %c8_i32_108 = arith.constant 8 : i32
    %517 = arith.muli %514, %c8_i32_108 : i32
    %518 = tpu.assume_multiple %517, 8 : i32
    %519 = arith.index_cast %516 : i32 to index
    %c0_109 = arith.constant 0 : index
    %520 = vector.load %arg5[%519, %c0_109] : memref<64x256xf32, #tpu.memory_space<vmem>>, vector<8x256xf32>
    %521 = arith.index_cast %518 : i32 to index
    %c0_110 = arith.constant 0 : index
    %522 = vector.load %arg5[%521, %c0_110] : memref<64x256xf32, #tpu.memory_space<vmem>>, vector<8x256xf32>
    %523 = tpu.concatenate %484, %509 in 1 : vector<8x32xf32>, vector<8x32xf32> -> vector<8x64xf32>
    %524 = arith.truncf %523 : vector<8x64xf32> to vector<8x64xbf16>
    %cst_111 = arith.constant dense<0.000000e+00> : vector<8x256xf32>
    %525 = tpu.matmul %524, %8, %cst_111 {dimension_numbers = #tpu.dot_dimension_numbers<[1], [0], [0], [1], [0, 0, 1, 1], [], []>} : vector<8x64xbf16>, vector<64x256xbf16>, vector<8x256xf32> -> vector<8x256xf32>
    %526 = vector.extract_strided_slice %520 {offsets = [0, 0], sizes = [8, 128], strides = [1, 1]} : vector<8x256xf32> to vector<8x128xf32>
    %527 = vector.extract_strided_slice %525 {offsets = [0, 0], sizes = [8, 128], strides = [1, 1]} : vector<8x256xf32> to vector<8x128xf32>
    %528 = arith.addf %526, %527 : vector<8x128xf32>
    %529 = vector.extract_strided_slice %522 {offsets = [0, 128], sizes = [8, 128], strides = [1, 1]} : vector<8x256xf32> to vector<8x128xf32>
    %530 = vector.extract_strided_slice %525 {offsets = [0, 128], sizes = [8, 128], strides = [1, 1]} : vector<8x256xf32> to vector<8x128xf32>
    %531 = arith.addf %529, %530 : vector<8x128xf32>
    %532 = vector.extract_strided_slice %528 {offsets = [0, 0], sizes = [8, 32], strides = [1, 1]} : vector<8x128xf32> to vector<8x32xf32>
    %533 = arith.negf %532 : vector<8x32xf32>
    %534 = math.exp %533 : vector<8x32xf32>
    %cst_112 = arith.constant 1.000000e+00 : f32
    %535 = vector.broadcast %cst_112 : f32 to vector<8x32xf32>
    %536 = arith.addf %535, %534 : vector<8x32xf32>
    %537 = arith.divf %535, %536 : vector<8x32xf32>
    %538 = vector.extract_strided_slice %528 {offsets = [0, 32], sizes = [8, 32], strides = [1, 1]} : vector<8x128xf32> to vector<8x32xf32>
    %539 = arith.negf %538 : vector<8x32xf32>
    %540 = math.exp %539 : vector<8x32xf32>
    %cst_113 = arith.constant 1.000000e+00 : f32
    %541 = vector.broadcast %cst_113 : f32 to vector<8x32xf32>
    %542 = arith.addf %541, %540 : vector<8x32xf32>
    %543 = arith.divf %541, %542 : vector<8x32xf32>
    %544 = vector.extract_strided_slice %528 {offsets = [0, 64], sizes = [8, 32], strides = [1, 1]} : vector<8x128xf32> to vector<8x32xf32>
    %545 = math.tanh %544 : vector<8x32xf32>
    %546 = vector.extract_strided_slice %528 {offsets = [0, 96], sizes = [8, 32], strides = [1, 1]} : vector<8x128xf32> to vector<8x32xf32>
    %547 = arith.negf %546 : vector<8x32xf32>
    %548 = math.exp %547 : vector<8x32xf32>
    %cst_114 = arith.constant 1.000000e+00 : f32
    %549 = vector.broadcast %cst_114 : f32 to vector<8x32xf32>
    %550 = arith.addf %549, %548 : vector<8x32xf32>
    %551 = arith.divf %549, %550 : vector<8x32xf32>
    %552 = arith.mulf %543, %482 : vector<8x32xf32>
    %553 = arith.mulf %537, %545 : vector<8x32xf32>
    %554 = arith.addf %552, %553 : vector<8x32xf32>
    %555 = math.tanh %554 : vector<8x32xf32>
    %556 = arith.mulf %551, %555 : vector<8x32xf32>
    %557 = vector.extract_strided_slice %531 {offsets = [0, 0], sizes = [8, 32], strides = [1, 1]} : vector<8x128xf32> to vector<8x32xf32>
    %558 = arith.negf %557 : vector<8x32xf32>
    %559 = math.exp %558 : vector<8x32xf32>
    %cst_115 = arith.constant 1.000000e+00 : f32
    %560 = vector.broadcast %cst_115 : f32 to vector<8x32xf32>
    %561 = arith.addf %560, %559 : vector<8x32xf32>
    %562 = arith.divf %560, %561 : vector<8x32xf32>
    %563 = vector.extract_strided_slice %531 {offsets = [0, 32], sizes = [8, 32], strides = [1, 1]} : vector<8x128xf32> to vector<8x32xf32>
    %564 = arith.negf %563 : vector<8x32xf32>
    %565 = math.exp %564 : vector<8x32xf32>
    %cst_116 = arith.constant 1.000000e+00 : f32
    %566 = vector.broadcast %cst_116 : f32 to vector<8x32xf32>
    %567 = arith.addf %566, %565 : vector<8x32xf32>
    %568 = arith.divf %566, %567 : vector<8x32xf32>
    %569 = vector.extract_strided_slice %531 {offsets = [0, 64], sizes = [8, 32], strides = [1, 1]} : vector<8x128xf32> to vector<8x32xf32>
    %570 = math.tanh %569 : vector<8x32xf32>
    %571 = vector.extract_strided_slice %531 {offsets = [0, 96], sizes = [8, 32], strides = [1, 1]} : vector<8x128xf32> to vector<8x32xf32>
    %572 = arith.negf %571 : vector<8x32xf32>
    %573 = math.exp %572 : vector<8x32xf32>
    %cst_117 = arith.constant 1.000000e+00 : f32
    %574 = vector.broadcast %cst_117 : f32 to vector<8x32xf32>
    %575 = arith.addf %574, %573 : vector<8x32xf32>
    %576 = arith.divf %574, %575 : vector<8x32xf32>
    %577 = arith.mulf %568, %507 : vector<8x32xf32>
    %578 = arith.mulf %562, %570 : vector<8x32xf32>
    %579 = arith.addf %577, %578 : vector<8x32xf32>
    %580 = math.tanh %579 : vector<8x32xf32>
    %581 = arith.mulf %576, %580 : vector<8x32xf32>
    %582 = arith.index_cast %516 : i32 to index
    %c0_118 = arith.constant 0 : index
    %583 = vector.load %arg4[%582, %c0_118] : memref<64x64xf32, #tpu.memory_space<vmem>>, vector<8x32xf32>
    tpu.vector_store %arg4[%582, %c0_118], %556 {strides = array<i32>} : memref<64x64xf32, #tpu.memory_space<vmem>>, vector<8x32xf32>,
    %584 = arith.index_cast %518 : i32 to index
    %c32_119 = arith.constant 32 : index
    %585 = vector.load %arg4[%584, %c32_119] : memref<64x64xf32, #tpu.memory_space<vmem>>, vector<8x32xf32>
    tpu.vector_store %arg4[%584, %c32_119], %581 {strides = array<i32>} : memref<64x64xf32, #tpu.memory_space<vmem>>, vector<8x32xf32>,
    %c8_i32_120 = arith.constant 8 : i32
    return
  }
}

</mosaic_0001>

<llo_original>
// kernel: tpu_custom_call.1
$region0: #{tpu_custom_call.1}
  #allocation0 [shape = 'u32[]', space=smem, size = 0x4, offset = 0x4, fixed_abs, tag = 'smem constant byte address 0x4 - core index']
  #allocation1 [shape = 'u32[144,128]{1,0:T(1,128)}', space=vmem, size = 0x12000, scoped, tag = 'internal scratch']
  #allocation2 [shape = 'f32[64,256]{1,0:T(8,128)}', space=vmem, size = 0x10000, scoped, tag = 'scratch operand']
  %s0 = inlined_call_operand.vmem [shape: f32[64,16], index: 0, kind: input, shape index: {}]
  %s1 = inlined_call_operand.vmem [shape: bf16[16,256], index: 1, kind: input, shape index: {}]
  %s2 = inlined_call_operand.vmem [shape: bf16[64,256], index: 2, kind: input, shape index: {}]
  %s3 = inlined_call_operand.vmem [shape: f32[1,256], index: 3, kind: input, shape index: {}]
  %s4 = inlined_call_operand.hbm [shape: f32[64,64], index: 4, kind: output, shape index: {}]
  %s5 = sld [smem:[#allocation0]]
  $region26: #{tpu_custom_call.1} parent=0
    _
  %s7 = ssub.s32 1, %s5
  %s8 = scalar_select 0, %s7, %s5
  $region1: #{tpu_custom_call.1} parent=0
    #allocation3 [shape = 'u8[32768]{0}', space=vmem, size = 0x8000, scoped, tag = 'output window, operand 0, single buffered']
    #allocation4 [shape = 's32[1]{0}', space=sflag, size = 0x4, scoped, tag = 'scoped memory for tpu_custom_call.1']
    %9 = vsyncpa [#allocation4], 0
    // Predicated region
    $region2: #{tpu_custom_call.1} parent=1 // pred_check
      _
    $region3: #{tpu_custom_call.1} parent=1 // pred_check_branch
      %11 = sbr.rel (0) target = $region5
    $region4: #{tpu_custom_call.1} parent=1 // pred_region
      _
    $region5: #{tpu_custom_call.1} parent=1 // pred_fallthru
      _
    // Predicated region
    $region6: #{tpu_custom_call.1} parent=1 // pred_check
      _
    $region7: #{tpu_custom_call.1} parent=1 // pred_check_branch
      %13 = sbr.rel (0) target = $region9
    $region8: #{tpu_custom_call.1} parent=1 // pred_region
      _
    $region9: #{tpu_custom_call.1} parent=1 // pred_fallthru
      _
    // Predicated region
    $region10: #{tpu_custom_call.1} parent=1 // pred_check
      _
    $region11: #{tpu_custom_call.1} parent=1 // pred_check_branch
      %15 = sbr.rel (0) target = $region13
    $region12: #{tpu_custom_call.1} parent=1 // pred_region
      _
    $region13: #{tpu_custom_call.1} parent=1 // pred_fallthru
      _
    // Predicated region
    $region14: #{tpu_custom_call.1} parent=1 // pred_check
      _
    $region15: #{tpu_custom_call.1} parent=1 // pred_check_branch
      %17 = sbr.rel (0) target = $region17
    $region16: #{tpu_custom_call.1} parent=1 // pred_region
      _
    $region17: #{tpu_custom_call.1} parent=1 // pred_fallthru
      _
    %v19 = vld [vmem:[%s0] sm:$0xff]
    %v20 = vld [vmem:[%s0 + $0x8] sm:$0xff]
    %v21 = vld [vmem:[%s0 + $0x10] sm:$0xff]
    %v22 = vld [vmem:[%s0 + $0x18] sm:$0xff]
    %v23 = vld [vmem:[%s0 + $0x20] sm:$0xff]
    %v24 = vld [vmem:[%s0 + $0x28] sm:$0xff]
    %v25 = vld [vmem:[%s0 + $0x30] sm:$0xff]
    %v26 = vld [vmem:[%s0 + $0x38] sm:$0xff]
    %v27 = vpack.c.bf16 %v20, %v19
    %v28 = vpack.c.bf16 %v22, %v21
    %v29 = vpack.c.bf16 %v24, %v23
    %v30 = vpack.c.bf16 %v26, %v25
    %v31 = vld [vmem:[%s1] sm:$0xff]
    %v32 = vld [vmem:[%s1 + $0x8] sm:$0xff]
    %v33 = vld [vmem:[%s3] sm:$0x3]
    %v35 = vlaneseq
    %v36 = vshrl.u32 %v35, 7
    %v37 = vsub.s32 0, %v36
    %v38 = vrot.slane %v33, %v37
    %v39 = vlaneseq
    %v40 = vshrl.u32 %v39, 7
    %v41 = vsub.s32 1, %v40
    %v42 = vrot.slane %v33, %v41
    %v47 = vunpack.c.l.b16 %v31
    %v48 = vunpack.c.h.b16 %v31
    %v49 = vunpack.c.l.b16 %v32
    %v50 = vunpack.c.h.b16 %v32
    %v51 = vpack.c.b16 %v49, %v47
    %v52 = vpack.c.b16 %v50, %v48
    %vm55 = vcmask 130048
    %v57 = vsel %vm55, %v27, 0
    %v60 = vsel %vm55, %v28, 0
    %v63 = vsel %vm55, %v29, 0
    %v66 = vsel %vm55, %v30, 0
    %68 = vmatprep.subr.bf16.mxu0 %v52
    %69 = vmatpush1.bf16.msra.mxu0 %v51
    %70 = vmatprep.subr.bf16.mxu0 0
    %71 = vmatpush1.bf16.msra.mxu0 0
    %72 = vmatprep.subr.bf16.mxu0 0
    %73 = vmatpush1.bf16.msra.mxu0 0
    %74 = vmatprep.subr.bf16.mxu0 0
    %75 = vmatpush1.bf16.msra.mxu0 0
    %76 = vmatprep.subr.bf16.mxu0 0
    %77 = vmatpush1.bf16.msra.mxu0 0
    %78 = vmatprep.subr.bf16.mxu0 0
    %79 = vmatpush1.bf16.msra.mxu0 0
    %80 = vmatprep.subr.bf16.mxu0 0
    %81 = vmatpush1.bf16.msra.mxu0 0
    %82 = vmatprep.subr.bf16.mxu0 0
    %83 = vmatpush1.bf16.msra.mxu0 0
    %84 = vmatprep.subr.bf16.mxu0 0
    %85 = vmatpush1.bf16.msra.mxu0 0
    %86 = vmatprep.subr.bf16.mxu0 0
    %87 = vmatpush1.bf16.msra.mxu0 0
    %88 = vmatprep.subr.bf16.mxu0 0
    %89 = vmatpush1.bf16.msra.mxu0 0
    %90 = vmatprep.subr.bf16.mxu0 0
    %91 = vmatpush1.bf16.msra.mxu0 0
    %92 = vmatprep.subr.bf16.mxu0 0
    %93 = vmatpush1.bf16.msra.mxu0 0
    %94 = vmatprep.subr.bf16.mxu0 0
    %95 = vmatpush1.bf16.msra.mxu0 0
    %96 = vmatprep.subr.bf16.mxu0 0
    %97 = vmatpush1.bf16.msra.mxu0 0
    %98 = vmatprep.subr.bf16.mxu0 0
    %99 = vmatpush1.bf16.msra.mxu0 0
    %100 = vmatprep.mubr.bf16.mxu0 0
    %101 = vmatmul.mubr.bf16.gmra.mrb[0].mxu0 %v57
    %v102 = vpop.f32.mrb[0].mxu0
    %v103 = vadd.f32 %v38, %v102
    %v104 = vpop.f32.mrb[0].mxu0
    %v105 = vadd.f32 %v42, %v104
    %v106 = vpop.f32.mrb[0].mxu0
    %v107 = vadd.f32 %v38, %v106
    %v108 = vpop.f32.mrb[0].mxu0
    %v109 = vadd.f32 %v42, %v108
    %110 = vmatprep.mubr.bf16.mxu0 0
    %111 = vmatmul.mubr.bf16.gmra.mrb[0].mxu0 %v60
    %v112 = vpop.f32.mrb[0].mxu0
    %v113 = vadd.f32 %v38, %v112
    %v114 = vpop.f32.mrb[0].mxu0
    %v115 = vadd.f32 %v42, %v114
    %v116 = vpop.f32.mrb[0].mxu0
    %v117 = vadd.f32 %v38, %v116
    %v118 = vpop.f32.mrb[0].mxu0
    %v119 = vadd.f32 %v42, %v118
    %120 = vmatprep.mubr.bf16.mxu0 0
    %121 = vmatmul.mubr.bf16.gmra.mrb[0].mxu0 %v63
    %v122 = vpop.f32.mrb[0].mxu0
    %v123 = vadd.f32 %v38, %v122
    %v124 = vpop.f32.mrb[0].mxu0
    %v125 = vadd.f32 %v42, %v124
    %v126 = vpop.f32.mrb[0].mxu0
    %v127 = vadd.f32 %v38, %v126
    %v128 = vpop.f32.mrb[0].mxu0
    %v129 = vadd.f32 %v42, %v128
    %130 = vmatprep.mubr.bf16.mxu0 0
    %131 = vmatmul.mubr.bf16.gmra.mrb[0].mxu0 %v66
    %v132 = vpop.f32.mrb[0].mxu0
    %v133 = vadd.f32 %v38, %v132
    %v134 = vpop.f32.mrb[0].mxu0
    %v135 = vadd.f32 %v42, %v134
    %v136 = vpop.f32.mrb[0].mxu0
    %v137 = vadd.f32 %v38, %v136
    %v138 = vpop.f32.mrb[0].mxu0
    %v139 = vadd.f32 %v42, %v138
    %140 = vdwg.mxu0
    %141 = vst [vmem:[#allocation2] sm:$0xff] %v103
    %142 = vst [vmem:[#allocation2 + $0x8] sm:$0xff] %v105
    %143 = vst [vmem:[#allocation2 + $0x10] sm:$0xff] %v107
    %144 = vst [vmem:[#allocation2 + $0x18] sm:$0xff] %v109
    %145 = vst [vmem:[#allocation2 + $0x20] sm:$0xff] %v113
    %146 = vst [vmem:[#allocation2 + $0x28] sm:$0xff] %v115
    %147 = vst [vmem:[#allocation2 + $0x30] sm:$0xff] %v117
    %148 = vst [vmem:[#allocation2 + $0x38] sm:$0xff] %v119
    %149 = vst [vmem:[#allocation2 + $0x40] sm:$0xff] %v123
    %150 = vst [vmem:[#allocation2 + $0x48] sm:$0xff] %v125
    %151 = vst [vmem:[#allocation2 + $0x50] sm:$0xff] %v127
    %152 = vst [vmem:[#allocation2 + $0x58] sm:$0xff] %v129
    %153 = vst [vmem:[#allocation2 + $0x60] sm:$0xff] %v133
    %154 = vst [vmem:[#allocation2 + $0x68] sm:$0xff] %v135
    %155 = vst [vmem:[#allocation2 + $0x70] sm:$0xff] %v137
    %156 = vst [vmem:[#allocation2 + $0x78] sm:$0xff] %v139
    %v157 = vld [vmem:[%s2] sm:$0xff]
    %v158 = vld [vmem:[%s2 + $0x8] sm:$0xff]
    %v159 = vld [vmem:[%s2 + $0x10] sm:$0xff]
    %v160 = vld [vmem:[%s2 + $0x18] sm:$0xff]
    %v161 = vld [vmem:[%s2 + $0x20] sm:$0xff]
    %v162 = vld [vmem:[%s2 + $0x28] sm:$0xff]
    %v163 = vld [vmem:[%s2 + $0x30] sm:$0xff]
    %v164 = vld [vmem:[%s2 + $0x38] sm:$0xff]
    %s165 = smul.u32 0, 2
    %s166 = smul.addr %s165, 8
    %s167 = scalar_lea.vmem [#allocation2], %s166
    %v168 = vld [vmem:[%s167] sm:$0xff]
    %s169 = smul.u32 7, 2
    %s170 = smul.addr %s169, 8
    %s171 = scalar_lea.vmem [#allocation2], %s170
    %v172 = vld [vmem:[%s171 + $0x8] sm:$0xff]
    %v173 = vpack.c.bf16 0.0, 0.0
    %v182 = vunpack.c.l.b16 %v157
    %v183 = vunpack.c.h.b16 %v157
    %v184 = vunpack.c.l.b16 %v158
    %v185 = vunpack.c.h.b16 %v158
    %v186 = vunpack.c.l.b16 %v159
    %v187 = vunpack.c.h.b16 %v159
    %v188 = vunpack.c.l.b16 %v160
    %v189 = vunpack.c.h.b16 %v160
    %v190 = vunpack.c.l.b16 %v161
    %v191 = vunpack.c.h.b16 %v161
    %v192 = vunpack.c.l.b16 %v162
    %v193 = vunpack.c.h.b16 %v162
    %v194 = vunpack.c.l.b16 %v163
    %v195 = vunpack.c.h.b16 %v163
    %v196 = vunpack.c.l.b16 %v164
    %v197 = vunpack.c.h.b16 %v164
    %v198 = vpack.c.b16 %v184, %v182
    %v199 = vpack.c.b16 %v185, %v183
    %v200 = vpack.c.b16 %v188, %v186
    %v201 = vpack.c.b16 %v189, %v187
    %v202 = vpack.c.b16 %v192, %v190
    %v203 = vpack.c.b16 %v193, %v191
    %v204 = vpack.c.b16 %v196, %v194
    %v205 = vpack.c.b16 %v197, %v195
    %vm214 = vcmask 523264
    %v216 = vsel %vm214, %v173, 0
    %218 = vmatprep.subr.bf16.mxu0 %v199
    %219 = vmatpush1.bf16.msra.mxu0 %v198
    %220 = vmatprep.subr.bf16.mxu0 %v201
    %221 = vmatpush1.bf16.msra.mxu0 %v200
    %222 = vmatprep.subr.bf16.mxu0 %v203
    %223 = vmatpush1.bf16.msra.mxu0 %v202
    %224 = vmatprep.subr.bf16.mxu0 %v205
    %225 = vmatpush1.bf16.msra.mxu0 %v204
    %226 = vmatprep.subr.bf16.mxu0 0
    %227 = vmatpush1.bf16.msra.mxu0 0
    %228 = vmatprep.subr.bf16.mxu0 0
    %229 = vmatpush1.bf16.msra.mxu0 0
    %230 = vmatprep.subr.bf16.mxu0 0
    %231 = vmatpush1.bf16.msra.mxu0 0
    %232 = vmatprep.subr.bf16.mxu0 0
    %233 = vmatpush1.bf16.msra.mxu0 0
    %234 = vmatprep.subr.bf16.mxu0 0
    %235 = vmatpush1.bf16.msra.mxu0 0
    %236 = vmatprep.subr.bf16.mxu0 0
    %237 = vmatpush1.bf16.msra.mxu0 0
    %238 = vmatprep.subr.bf16.mxu0 0
    %239 = vmatpush1.bf16.msra.mxu0 0
    %240 = vmatprep.subr.bf16.mxu0 0
    %241 = vmatpush1.bf16.msra.mxu0 0
    %242 = vmatprep.subr.bf16.mxu0 0
    %243 = vmatpush1.bf16.msra.mxu0 0
    %244 = vmatprep.subr.bf16.mxu0 0
    %245 = vmatpush1.bf16.msra.mxu0 0
    %246 = vmatprep.subr.bf16.mxu0 0
    %247 = vmatpush1.bf16.msra.mxu0 0
    %248 = vmatprep.subr.bf16.mxu0 0
    %249 = vmatpush1.bf16.msra.mxu0 0
    %250 = vmatprep.mubr.bf16.mxu0 0
    %251 = vmatmul.mubr.bf16.gmra.mrb[0].mxu0 %v216
    %v252 = vpop.f32.mrb[0].mxu0
    %v253 = vadd.f32 0.0, %v252
    %v254 = vpop.f32.mrb[0].mxu0
    %v255 = vadd.f32 0.0, %v254
    %v256 = vpop.f32.mrb[0].mxu0
    %v257 = vpop.f32.mrb[0].mxu0
    %258 = vdwg.mxu0
    %v259 = vadd.f32 %v168, %v253
    %v260 = vadd.f32 %v172, %v255
    %v261 = vxor.u32 %v259, 2147483648
    %v262 = vmul.f32 %v261, 1.442695
    %v263 = vpow.pop %v262
    %v264 = vadd.f32 %v263, 1.0
    %v265 = vrcp.pop %v264
    %v266 = vmul.f32 1.0, %v265
    %v267 = vtanh.pop %v259
    %v268 = vmul.f32 %v266, 0.0
    %270 = vrot.lane.b32.xlu0 %v267, 64
    %v271 = vpop.permute.xlu0 %270
    %v273 = vmul.f32 %v266, %v271
    %275 = vrot.lane.b32.xlu0 %v273, 32
    %v276 = vpop.permute.xlu0 %275
    %v278 = vadd.f32 %v268, %v276
    %v279 = vtanh.pop %v278
    %281 = vrot.lane.b32.xlu0 %v279, 64
    %v282 = vpop.permute.xlu0 %281
    %v284 = vmul.f32 %v266, %v282
    %v285 = vxor.u32 %v260, 2147483648
    %v286 = vmul.f32 %v285, 1.442695
    %v287 = vpow.pop %v286
    %v288 = vadd.f32 %v287, 1.0
    %v289 = vrcp.pop %v288
    %v290 = vmul.f32 1.0, %v289
    %v291 = vtanh.pop %v260
    %v292 = vmul.f32 %v290, 0.0
    %294 = vrot.lane.b32.xlu0 %v291, 64
    %v295 = vpop.permute.xlu0 %294
    %v297 = vmul.f32 %v290, %v295
    %299 = vrot.lane.b32.xlu0 %v297, 32
    %v300 = vpop.permute.xlu0 %299
    %v302 = vadd.f32 %v292, %v300
    %v303 = vtanh.pop %v302
    %305 = vrot.lane.b32.xlu0 %v303, 64
    %v306 = vpop.permute.xlu0 %305
    %v308 = vmul.f32 %v290, %v306
    %310 = vrot.lane.b32.xlu0 %v284, 32
    %v311 = vpop.permute.xlu0 %310
    %vm313 = vcmask 261120
    %314 = vst.msk [vmem:[#allocation3] sm:$0xff] %vm313, %v311
    %316 = vrot.lane.b32.xlu0 %v308, 64
    %v317 = vpop.permute.xlu0 %316
    %s319 = scalar_lea.vmem [#allocation3], 56
    %vm320 = vcmask 523520
    %321 = vst.msk [vmem:[%s319] sm:$0xff] %vm320, %v317
    %s322 = smul.u32 1, 2
    %s323 = smul.addr %s322, 8
    %s324 = scalar_lea.vmem [#allocation2], %s323
    %v325 = vld [vmem:[%s324] sm:$0xff]
    %s326 = smul.u32 6, 2
    %s327 = smul.addr %s326, 8
    %s328 = scalar_lea.vmem [#allocation2], %s327
    %v329 = vld [vmem:[%s328 + $0x8] sm:$0xff]
    %v330 = vsel %vm313, %v311, %v317
    %v331 = vpack.c.bf16 %v330, %v330
    %v333 = vsel %vm214, %v331, 0
    %335 = vmatprep.subr.bf16.mxu0 %v199
    %336 = vmatpush1.bf16.msra.mxu0 %v198
    %337 = vmatprep.subr.bf16.mxu0 %v201
    %338 = vmatpush1.bf16.msra.mxu0 %v200
    %339 = vmatprep.subr.bf16.mxu0 %v203
    %340 = vmatpush1.bf16.msra.mxu0 %v202
    %341 = vmatprep.subr.bf16.mxu0 %v205
    %342 = vmatpush1.bf16.msra.mxu0 %v204
    %343 = vmatprep.subr.bf16.mxu0 0
    %344 = vmatpush1.bf16.msra.mxu0 0
    %345 = vmatprep.subr.bf16.mxu0 0
    %346 = vmatpush1.bf16.msra.mxu0 0
    %347 = vmatprep.subr.bf16.mxu0 0
    %348 = vmatpush1.bf16.msra.mxu0 0
    %349 = vmatprep.subr.bf16.mxu0 0
    %350 = vmatpush1.bf16.msra.mxu0 0
    %351 = vmatprep.subr.bf16.mxu0 0
    %352 = vmatpush1.bf16.msra.mxu0 0
    %353 = vmatprep.subr.bf16.mxu0 0
    %354 = vmatpush1.bf16.msra.mxu0 0
    %355 = vmatprep.subr.bf16.mxu0 0
    %356 = vmatpush1.bf16.msra.mxu0 0
    %357 = vmatprep.subr.bf16.mxu0 0
    %358 = vmatpush1.bf16.msra.mxu0 0
    %359 = vmatprep.subr.bf16.mxu0 0
    %360 = vmatpush1.bf16.msra.mxu0 0
    %361 = vmatprep.subr.bf16.mxu0 0
    %362 = vmatpush1.bf16.msra.mxu0 0
    %363 = vmatprep.subr.bf16.mxu0 0
    %364 = vmatpush1.bf16.msra.mxu0 0
    %365 = vmatprep.subr.bf16.mxu0 0
    %366 = vmatpush1.bf16.msra.mxu0 0
    %367 = vmatprep.mubr.bf16.mxu0 0
    %368 = vmatmul.mubr.bf16.gmra.mrb[0].mxu0 %v333
    %v369 = vpop.f32.mrb[0].mxu0
    %v370 = vadd.f32 0.0, %v369
    %v371 = vpop.f32.mrb[0].mxu0
    %v372 = vadd.f32 0.0, %v371
    %v373 = vpop.f32.mrb[0].mxu0
    %v374 = vpop.f32.mrb[0].mxu0
    %375 = vdwg.mxu0
    %v376 = vadd.f32 %v325, %v370
    %v377 = vadd.f32 %v329, %v372
    %v378 = vxor.u32 %v376, 2147483648
    %v379 = vmul.f32 %v378, 1.442695
    %v380 = vpow.pop %v379
    %v381 = vadd.f32 %v380, 1.0
    %v382 = vrcp.pop %v381
    %v383 = vmul.f32 1.0, %v382
    %v384 = vtanh.pop %v376
    %v385 = vmul.f32 %v383, %v278
    %387 = vrot.lane.b32.xlu0 %v384, 64
    %v388 = vpop.permute.xlu0 %387
    %v390 = vmul.f32 %v383, %v388
    %392 = vrot.lane.b32.xlu0 %v390, 32
    %v393 = vpop.permute.xlu0 %392
    %v395 = vadd.f32 %v385, %v393
    %v396 = vtanh.pop %v395
    %398 = vrot.lane.b32.xlu0 %v396, 64
    %v399 = vpop.permute.xlu0 %398
    %v401 = vmul.f32 %v383, %v399
    %v402 = vxor.u32 %v377, 2147483648
    %v403 = vmul.f32 %v402, 1.442695
    %v404 = vpow.pop %v403
    %v405 = vadd.f32 %v404, 1.0
    %v406 = vrcp.pop %v405
    %v407 = vmul.f32 1.0, %v406
    %v408 = vtanh.pop %v377
    %v409 = vmul.f32 %v407, %v302
    %411 = vrot.lane.b32.xlu0 %v408, 64
    %v412 = vpop.permute.xlu0 %411
    %v414 = vmul.f32 %v407, %v412
    %416 = vrot.lane.b32.xlu0 %v414, 32
    %v417 = vpop.permute.xlu0 %416
    %v419 = vadd.f32 %v409, %v417
    %v420 = vtanh.pop %v419
    %422 = vrot.lane.b32.xlu0 %v420, 64
    %v423 = vpop.permute.xlu0 %422
    %v425 = vmul.f32 %v407, %v423
    %427 = vrot.lane.b32.xlu0 %v401, 32
    %v428 = vpop.permute.xlu0 %427
    %s430 = scalar_lea.vmem [#allocation3], 8
    %431 = vst.msk [vmem:[%s430] sm:$0xff] %vm313, %v428
    %433 = vrot.lane.b32.xlu0 %v425, 64
    %v434 = vpop.permute.xlu0 %433
    %s436 = scalar_lea.vmem [#allocation3], 48
    %437 = vst.msk [vmem:[%s436] sm:$0xff] %vm320, %v434
    %s438 = smul.u32 2, 2
    %s439 = smul.addr %s438, 8
    %s440 = scalar_lea.vmem [#allocation2], %s439
    %v441 = vld [vmem:[%s440] sm:$0xff]
    %s442 = smul.u32 5, 2
    %s443 = smul.addr %s442, 8
    %s444 = scalar_lea.vmem [#allocation2], %s443
    %v445 = vld [vmem:[%s444 + $0x8] sm:$0xff]
    %v446 = vsel %vm313, %v428, %v434
    %v447 = vpack.c.bf16 %v446, %v446
    %v449 = vsel %vm214, %v447, 0
    %451 = vmatprep.subr.bf16.mxu0 %v199
    %452 = vmatpush1.bf16.msra.mxu0 %v198
    %453 = vmatprep.subr.bf16.mxu0 %v201
    %454 = vmatpush1.bf16.msra.mxu0 %v200
    %455 = vmatprep.subr.bf16.mxu0 %v203
    %456 = vmatpush1.bf16.msra.mxu0 %v202
    %457 = vmatprep.subr.bf16.mxu0 %v205
    %458 = vmatpush1.bf16.msra.mxu0 %v204
    %459 = vmatprep.subr.bf16.mxu0 0
    %460 = vmatpush1.bf16.msra.mxu0 0
    %461 = vmatprep.subr.bf16.mxu0 0
    %462 = vmatpush1.bf16.msra.mxu0 0
    %463 = vmatprep.subr.bf16.mxu0 0
    %464 = vmatpush1.bf16.msra.mxu0 0
    %465 = vmatprep.subr.bf16.mxu0 0
    %466 = vmatpush1.bf16.msra.mxu0 0
    %467 = vmatprep.subr.bf16.mxu0 0
    %468 = vmatpush1.bf16.msra.mxu0 0
    %469 = vmatprep.subr.bf16.mxu0 0
    %470 = vmatpush1.bf16.msra.mxu0 0
    %471 = vmatprep.subr.bf16.mxu0 0
    %472 = vmatpush1.bf16.msra.mxu0 0
    %473 = vmatprep.subr.bf16.mxu0 0
    %474 = vmatpush1.bf16.msra.mxu0 0
    %475 = vmatprep.subr.bf16.mxu0 0
    %476 = vmatpush1.bf16.msra.mxu0 0
    %477 = vmatprep.subr.bf16.mxu0 0
    %478 = vmatpush1.bf16.msra.mxu0 0
    %479 = vmatprep.subr.bf16.mxu0 0
    %480 = vmatpush1.bf16.msra.mxu0 0
    %481 = vmatprep.subr.bf16.mxu0 0
    %482 = vmatpush1.bf16.msra.mxu0 0
    %483 = vmatprep.mubr.bf16.mxu0 0
    %484 = vmatmul.mubr.bf16.gmra.mrb[0].mxu0 %v449
    %v485 = vpop.f32.mrb[0].mxu0
    %v486 = vadd.f32 0.0, %v485
    %v487 = vpop.f32.mrb[0].mxu0
    %v488 = vadd.f32 0.0, %v487
    %v489 = vpop.f32.mrb[0].mxu0
    %v490 = vpop.f32.mrb[0].mxu0
    %491 = vdwg.mxu0
    %v492 = vadd.f32 %v441, %v486
    %v493 = vadd.f32 %v445, %v488
    %v494 = vxor.u32 %v492, 2147483648
    %v495 = vmul.f32 %v494, 1.442695
    %v496 = vpow.pop %v495
    %v497 = vadd.f32 %v496, 1.0
    %v498 = vrcp.pop %v497
    %v499 = vmul.f32 1.0, %v498
    %v500 = vtanh.pop %v492
    %v501 = vmul.f32 %v499, %v395
    %503 = vrot.lane.b32.xlu0 %v500, 64
    %v504 = vpop.permute.xlu0 %503
    %v506 = vmul.f32 %v499, %v504
    %508 = vrot.lane.b32.xlu0 %v506, 32
    %v509 = vpop.permute.xlu0 %508
    %v511 = vadd.f32 %v501, %v509
    %v512 = vtanh.pop %v511
    %514 = vrot.lane.b32.xlu0 %v512, 64
    %v515 = vpop.permute.xlu0 %514
    %v517 = vmul.f32 %v499, %v515
    %v518 = vxor.u32 %v493, 2147483648
    %v519 = vmul.f32 %v518, 1.442695
    %v520 = vpow.pop %v519
    %v521 = vadd.f32 %v520, 1.0
    %v522 = vrcp.pop %v521
    %v523 = vmul.f32 1.0, %v522
    %v524 = vtanh.pop %v493
    %v525 = vmul.f32 %v523, %v419
    %527 = vrot.lane.b32.xlu0 %v524, 64
    %v528 = vpop.permute.xlu0 %527
    %v530 = vmul.f32 %v523, %v528
    %532 = vrot.lane.b32.xlu0 %v530, 32
    %v533 = vpop.permute.xlu0 %532
    %v535 = vadd.f32 %v525, %v533
    %v536 = vtanh.pop %v535
    %538 = vrot.lane.b32.xlu0 %v536, 64
    %v539 = vpop.permute.xlu0 %538
    %v541 = vmul.f32 %v523, %v539
    %543 = vrot.lane.b32.xlu0 %v517, 32
    %v544 = vpop.permute.xlu0 %543
    %s546 = scalar_lea.vmem [#allocation3], 16
    %547 = vst.msk [vmem:[%s546] sm:$0xff] %vm313, %v544
    %549 = vrot.lane.b32.xlu0 %v541, 64
    %v550 = vpop.permute.xlu0 %549
    %s552 = scalar_lea.vmem [#allocation3], 40
    %553 = vst.msk [vmem:[%s552] sm:$0xff] %vm320, %v550
    %s554 = smul.u32 3, 2
    %s555 = smul.addr %s554, 8
    %s556 = scalar_lea.vmem [#allocation2], %s555
    %v557 = vld [vmem:[%s556] sm:$0xff]
    %s558 = smul.u32 4, 2
    %s559 = smul.addr %s558, 8
    %s560 = scalar_lea.vmem [#allocation2], %s559
    %v561 = vld [vmem:[%s560 + $0x8] sm:$0xff]
    %v562 = vsel %vm313, %v544, %v550
    %v563 = vpack.c.bf16 %v562, %v562
    %v565 = vsel %vm214, %v563, 0
    %567 = vmatprep.subr.bf16.mxu0 %v199
    %568 = vmatpush1.bf16.msra.mxu0 %v198
    %569 = vmatprep.subr.bf16.mxu0 %v201
    %570 = vmatpush1.bf16.msra.mxu0 %v200
    %571 = vmatprep.subr.bf16.mxu0 %v203
    %572 = vmatpush1.bf16.msra.mxu0 %v202
    %573 = vmatprep.subr.bf16.mxu0 %v205
    %574 = vmatpush1.bf16.msra.mxu0 %v204
    %575 = vmatprep.subr.bf16.mxu0 0
    %576 = vmatpush1.bf16.msra.mxu0 0
    %577 = vmatprep.subr.bf16.mxu0 0
    %578 = vmatpush1.bf16.msra.mxu0 0
    %579 = vmatprep.subr.bf16.mxu0 0
    %580 = vmatpush1.bf16.msra.mxu0 0
    %581 = vmatprep.subr.bf16.mxu0 0
    %582 = vmatpush1.bf16.msra.mxu0 0
    %583 = vmatprep.subr.bf16.mxu0 0
    %584 = vmatpush1.bf16.msra.mxu0 0
    %585 = vmatprep.subr.bf16.mxu0 0
    %586 = vmatpush1.bf16.msra.mxu0 0
    %587 = vmatprep.subr.bf16.mxu0 0
    %588 = vmatpush1.bf16.msra.mxu0 0
    %589 = vmatprep.subr.bf16.mxu0 0
    %590 = vmatpush1.bf16.msra.mxu0 0
    %591 = vmatprep.subr.bf16.mxu0 0
    %592 = vmatpush1.bf16.msra.mxu0 0
    %593 = vmatprep.subr.bf16.mxu0 0
    %594 = vmatpush1.bf16.msra.mxu0 0
    %595 = vmatprep.subr.bf16.mxu0 0
    %596 = vmatpush1.bf16.msra.mxu0 0
    %597 = vmatprep.subr.bf16.mxu0 0
    %598 = vmatpush1.bf16.msra.mxu0 0
    %599 = vmatprep.mubr.bf16.mxu0 0
    %600 = vmatmul.mubr.bf16.gmra.mrb[0].mxu0 %v565
    %v601 = vpop.f32.mrb[0].mxu0
    %v602 = vadd.f32 0.0, %v601
    %v603 = vpop.f32.mrb[0].mxu0
    %v604 = vadd.f32 0.0, %v603
    %v605 = vpop.f32.mrb[0].mxu0
    %v606 = vpop.f32.mrb[0].mxu0
    %607 = vdwg.mxu0
    %v608 = vadd.f32 %v557, %v602
    %v609 = vadd.f32 %v561, %v604
    %v610 = vxor.u32 %v608, 2147483648
    %v611 = vmul.f32 %v610, 1.442695
    %v612 = vpow.pop %v611
    %v613 = vadd.f32 %v612, 1.0
    %v614 = vrcp.pop %v613
    %v615 = vmul.f32 1.0, %v614
    %v616 = vtanh.pop %v608
    %v617 = vmul.f32 %v615, %v511
    %619 = vrot.lane.b32.xlu0 %v616, 64
    %v620 = vpop.permute.xlu0 %619
    %v622 = vmul.f32 %v615, %v620
    %624 = vrot.lane.b32.xlu0 %v622, 32
    %v625 = vpop.permute.xlu0 %624
    %v627 = vadd.f32 %v617, %v625
    %v628 = vtanh.pop %v627
    %630 = vrot.lane.b32.xlu0 %v628, 64
    %v631 = vpop.permute.xlu0 %630
    %v633 = vmul.f32 %v615, %v631
    %v634 = vxor.u32 %v609, 2147483648
    %v635 = vmul.f32 %v634, 1.442695
    %v636 = vpow.pop %v635
    %v637 = vadd.f32 %v636, 1.0
    %v638 = vrcp.pop %v637
    %v639 = vmul.f32 1.0, %v638
    %v640 = vtanh.pop %v609
    %v641 = vmul.f32 %v639, %v535
    %643 = vrot.lane.b32.xlu0 %v640, 64
    %v644 = vpop.permute.xlu0 %643
    %v646 = vmul.f32 %v639, %v644
    %648 = vrot.lane.b32.xlu0 %v646, 32
    %v649 = vpop.permute.xlu0 %648
    %v651 = vadd.f32 %v641, %v649
    %v652 = vtanh.pop %v651
    %654 = vrot.lane.b32.xlu0 %v652, 64
    %v655 = vpop.permute.xlu0 %654
    %v657 = vmul.f32 %v639, %v655
    %659 = vrot.lane.b32.xlu0 %v633, 32
    %v660 = vpop.permute.xlu0 %659
    %s662 = scalar_lea.vmem [#allocation3], 24
    %663 = vst.msk [vmem:[%s662] sm:$0xff] %vm313, %v660
    %665 = vrot.lane.b32.xlu0 %v657, 64
    %v666 = vpop.permute.xlu0 %665
    %s668 = scalar_lea.vmem [#allocation3], 32
    %669 = vst.msk [vmem:[%s668] sm:$0xff] %vm320, %v666
    %v670 = vld [vmem:[%s560] sm:$0xff]
    %v671 = vld [vmem:[%s556 + $0x8] sm:$0xff]
    %v672 = vsel %vm313, %v660, %v666
    %v673 = vpack.c.bf16 %v672, %v672
    %v675 = vsel %vm214, %v673, 0
    %677 = vmatprep.subr.bf16.mxu0 %v199
    %678 = vmatpush1.bf16.msra.mxu0 %v198
    %679 = vmatprep.subr.bf16.mxu0 %v201
    %680 = vmatpush1.bf16.msra.mxu0 %v200
    %681 = vmatprep.subr.bf16.mxu0 %v203
    %682 = vmatpush1.bf16.msra.mxu0 %v202
    %683 = vmatprep.subr.bf16.mxu0 %v205
    %684 = vmatpush1.bf16.msra.mxu0 %v204
    %685 = vmatprep.subr.bf16.mxu0 0
    %686 = vmatpush1.bf16.msra.mxu0 0
    %687 = vmatprep.subr.bf16.mxu0 0
    %688 = vmatpush1.bf16.msra.mxu0 0
    %689 = vmatprep.subr.bf16.mxu0 0
    %690 = vmatpush1.bf16.msra.mxu0 0
    %691 = vmatprep.subr.bf16.mxu0 0
    %692 = vmatpush1.bf16.msra.mxu0 0
    %693 = vmatprep.subr.bf16.mxu0 0
    %694 = vmatpush1.bf16.msra.mxu0 0
    %695 = vmatprep.subr.bf16.mxu0 0
    %696 = vmatpush1.bf16.msra.mxu0 0
    %697 = vmatprep.subr.bf16.mxu0 0
    %698 = vmatpush1.bf16.msra.mxu0 0
    %699 = vmatprep.subr.bf16.mxu0 0
    %700 = vmatpush1.bf16.msra.mxu0 0
    %701 = vmatprep.subr.bf16.mxu0 0
    %702 = vmatpush1.bf16.msra.mxu0 0
    %703 = vmatprep.subr.bf16.mxu0 0
    %704 = vmatpush1.bf16.msra.mxu0 0
    %705 = vmatprep.subr.bf16.mxu0 0
    %706 = vmatpush1.bf16.msra.mxu0 0
    %707 = vmatprep.subr.bf16.mxu0 0
    %708 = vmatpush1.bf16.msra.mxu0 0
    %709 = vmatprep.mubr.bf16.mxu0 0
    %710 = vmatmul.mubr.bf16.gmra.mrb[0].mxu0 %v675
    %v711 = vpop.f32.mrb[0].mxu0
    %v712 = vadd.f32 0.0, %v711
    %v713 = vpop.f32.mrb[0].mxu0
    %v714 = vadd.f32 0.0, %v713
    %v715 = vpop.f32.mrb[0].mxu0
    %v716 = vpop.f32.mrb[0].mxu0
    %717 = vdwg.mxu0
    %v718 = vadd.f32 %v670, %v712
    %v719 = vadd.f32 %v671, %v714
    %v720 = vxor.u32 %v718, 2147483648
    %v721 = vmul.f32 %v720, 1.442695
    %v722 = vpow.pop %v721
    %v723 = vadd.f32 %v722, 1.0
    %v724 = vrcp.pop %v723
    %v725 = vmul.f32 1.0, %v724
    %v726 = vtanh.pop %v718
    %v727 = vmul.f32 %v725, %v627
    %729 = vrot.lane.b32.xlu0 %v726, 64
    %v730 = vpop.permute.xlu0 %729
    %v732 = vmul.f32 %v725, %v730
    %734 = vrot.lane.b32.xlu0 %v732, 32
    %v735 = vpop.permute.xlu0 %734
    %v737 = vadd.f32 %v727, %v735
    %v738 = vtanh.pop %v737
    %740 = vrot.lane.b32.xlu0 %v738, 64
    %v741 = vpop.permute.xlu0 %740
    %v743 = vmul.f32 %v725, %v741
    %v744 = vxor.u32 %v719, 2147483648
    %v745 = vmul.f32 %v744, 1.442695
    %v746 = vpow.pop %v745
    %v747 = vadd.f32 %v746, 1.0
    %v748 = vrcp.pop %v747
    %v749 = vmul.f32 1.0, %v748
    %v750 = vtanh.pop %v719
    %v751 = vmul.f32 %v749, %v651
    %753 = vrot.lane.b32.xlu0 %v750, 64
    %v754 = vpop.permute.xlu0 %753
    %v756 = vmul.f32 %v749, %v754
    %758 = vrot.lane.b32.xlu0 %v756, 32
    %v759 = vpop.permute.xlu0 %758
    %v761 = vadd.f32 %v751, %v759
    %v762 = vtanh.pop %v761
    %764 = vrot.lane.b32.xlu0 %v762, 64
    %v765 = vpop.permute.xlu0 %764
    %v767 = vmul.f32 %v749, %v765
    %769 = vrot.lane.b32.xlu0 %v743, 32
    %v770 = vpop.permute.xlu0 %769
    %772 = vst.msk [vmem:[%s668] sm:$0xff] %vm313, %v770
    %774 = vrot.lane.b32.xlu0 %v767, 64
    %v775 = vpop.permute.xlu0 %774
    %777 = vst.msk [vmem:[%s662] sm:$0xff] %vm320, %v775
    %v778 = vld [vmem:[%s444] sm:$0xff]
    %v779 = vld [vmem:[%s440 + $0x8] sm:$0xff]
    %v780 = vsel %vm313, %v770, %v775
    %v781 = vpack.c.bf16 %v780, %v780
    %v783 = vsel %vm214, %v781, 0
    %785 = vmatprep.subr.bf16.mxu0 %v199
    %786 = vmatpush1.bf16.msra.mxu0 %v198
    %787 = vmatprep.subr.bf16.mxu0 %v201
    %788 = vmatpush1.bf16.msra.mxu0 %v200
    %789 = vmatprep.subr.bf16.mxu0 %v203
    %790 = vmatpush1.bf16.msra.mxu0 %v202
    %791 = vmatprep.subr.bf16.mxu0 %v205
    %792 = vmatpush1.bf16.msra.mxu0 %v204
    %793 = vmatprep.subr.bf16.mxu0 0
    %794 = vmatpush1.bf16.msra.mxu0 0
    %795 = vmatprep.subr.bf16.mxu0 0
    %796 = vmatpush1.bf16.msra.mxu0 0
    %797 = vmatprep.subr.bf16.mxu0 0
    %798 = vmatpush1.bf16.msra.mxu0 0
    %799 = vmatprep.subr.bf16.mxu0 0
    %800 = vmatpush1.bf16.msra.mxu0 0
    %801 = vmatprep.subr.bf16.mxu0 0
    %802 = vmatpush1.bf16.msra.mxu0 0
    %803 = vmatprep.subr.bf16.mxu0 0
    %804 = vmatpush1.bf16.msra.mxu0 0
    %805 = vmatprep.subr.bf16.mxu0 0
    %806 = vmatpush1.bf16.msra.mxu0 0
    %807 = vmatprep.subr.bf16.mxu0 0
    %808 = vmatpush1.bf16.msra.mxu0 0
    %809 = vmatprep.subr.bf16.mxu0 0
    %810 = vmatpush1.bf16.msra.mxu0 0
    %811 = vmatprep.subr.bf16.mxu0 0
    %812 = vmatpush1.bf16.msra.mxu0 0
    %813 = vmatprep.subr.bf16.mxu0 0
    %814 = vmatpush1.bf16.msra.mxu0 0
    %815 = vmatprep.subr.bf16.mxu0 0
    %816 = vmatpush1.bf16.msra.mxu0 0
    %817 = vmatprep.mubr.bf16.mxu0 0
    %818 = vmatmul.mubr.bf16.gmra.mrb[0].mxu0 %v783
    %v819 = vpop.f32.mrb[0].mxu0
    %v820 = vadd.f32 0.0, %v819
    %v821 = vpop.f32.mrb[0].mxu0
    %v822 = vadd.f32 0.0, %v821
    %v823 = vpop.f32.mrb[0].mxu0
    %v824 = vpop.f32.mrb[0].mxu0
    %825 = vdwg.mxu0
    %v826 = vadd.f32 %v778, %v820
    %v827 = vadd.f32 %v779, %v822
    %v828 = vxor.u32 %v826, 2147483648
    %v829 = vmul.f32 %v828, 1.442695
    %v830 = vpow.pop %v829
    %v831 = vadd.f32 %v830, 1.0
    %v832 = vrcp.pop %v831
    %v833 = vmul.f32 1.0, %v832
    %v834 = vtanh.pop %v826
    %v835 = vmul.f32 %v833, %v737
    %837 = vrot.lane.b32.xlu0 %v834, 64
    %v838 = vpop.permute.xlu0 %837
    %v840 = vmul.f32 %v833, %v838
    %842 = vrot.lane.b32.xlu0 %v840, 32
    %v843 = vpop.permute.xlu0 %842
    %v845 = vadd.f32 %v835, %v843
    %v846 = vtanh.pop %v845
    %848 = vrot.lane.b32.xlu0 %v846, 64
    %v849 = vpop.permute.xlu0 %848
    %v851 = vmul.f32 %v833, %v849
    %v852 = vxor.u32 %v827, 2147483648
    %v853 = vmul.f32 %v852, 1.442695
    %v854 = vpow.pop %v853
    %v855 = vadd.f32 %v854, 1.0
    %v856 = vrcp.pop %v855
    %v857 = vmul.f32 1.0, %v856
    %v858 = vtanh.pop %v827
    %v859 = vmul.f32 %v857, %v761
    %861 = vrot.lane.b32.xlu0 %v858, 64
    %v862 = vpop.permute.xlu0 %861
    %v864 = vmul.f32 %v857, %v862
    %866 = vrot.lane.b32.xlu0 %v864, 32
    %v867 = vpop.permute.xlu0 %866
    %v869 = vadd.f32 %v859, %v867
    %v870 = vtanh.pop %v869
    %872 = vrot.lane.b32.xlu0 %v870, 64
    %v873 = vpop.permute.xlu0 %872
    %v875 = vmul.f32 %v857, %v873
    %877 = vrot.lane.b32.xlu0 %v851, 32
    %v878 = vpop.permute.xlu0 %877
    %880 = vst.msk [vmem:[%s552] sm:$0xff] %vm313, %v878
    %882 = vrot.lane.b32.xlu0 %v875, 64
    %v883 = vpop.permute.xlu0 %882
    %885 = vst.msk [vmem:[%s546] sm:$0xff] %vm320, %v883
    %v886 = vld [vmem:[%s328] sm:$0xff]
    %v887 = vld [vmem:[%s324 + $0x8] sm:$0xff]
    %v888 = vsel %vm313, %v878, %v883
    %v889 = vpack.c.bf16 %v888, %v888
    %v891 = vsel %vm214, %v889, 0
    %893 = vmatprep.subr.bf16.mxu0 %v199
    %894 = vmatpush1.bf16.msra.mxu0 %v198
    %895 = vmatprep.subr.bf16.mxu0 %v201
    %896 = vmatpush1.bf16.msra.mxu0 %v200
    %897 = vmatprep.subr.bf16.mxu0 %v203
    %898 = vmatpush1.bf16.msra.mxu0 %v202
    %899 = vmatprep.subr.bf16.mxu0 %v205
    %900 = vmatpush1.bf16.msra.mxu0 %v204
    %901 = vmatprep.subr.bf16.mxu0 0
    %902 = vmatpush1.bf16.msra.mxu0 0
    %903 = vmatprep.subr.bf16.mxu0 0
    %904 = vmatpush1.bf16.msra.mxu0 0
    %905 = vmatprep.subr.bf16.mxu0 0
    %906 = vmatpush1.bf16.msra.mxu0 0
    %907 = vmatprep.subr.bf16.mxu0 0
    %908 = vmatpush1.bf16.msra.mxu0 0
    %909 = vmatprep.subr.bf16.mxu0 0
    %910 = vmatpush1.bf16.msra.mxu0 0
    %911 = vmatprep.subr.bf16.mxu0 0
    %912 = vmatpush1.bf16.msra.mxu0 0
    %913 = vmatprep.subr.bf16.mxu0 0
    %914 = vmatpush1.bf16.msra.mxu0 0
    %915 = vmatprep.subr.bf16.mxu0 0
    %916 = vmatpush1.bf16.msra.mxu0 0
    %917 = vmatprep.subr.bf16.mxu0 0
    %918 = vmatpush1.bf16.msra.mxu0 0
    %919 = vmatprep.subr.bf16.mxu0 0
    %920 = vmatpush1.bf16.msra.mxu0 0
    %921 = vmatprep.subr.bf16.mxu0 0
    %922 = vmatpush1.bf16.msra.mxu0 0
    %923 = vmatprep.subr.bf16.mxu0 0
    %924 = vmatpush1.bf16.msra.mxu0 0
    %925 = vmatprep.mubr.bf16.mxu0 0
    %926 = vmatmul.mubr.bf16.gmra.mrb[0].mxu0 %v891
    %v927 = vpop.f32.mrb[0].mxu0
    %v928 = vadd.f32 0.0, %v927
    %v929 = vpop.f32.mrb[0].mxu0
    %v930 = vadd.f32 0.0, %v929
    %v931 = vpop.f32.mrb[0].mxu0
    %v932 = vpop.f32.mrb[0].mxu0
    %933 = vdwg.mxu0
    %v934 = vadd.f32 %v886, %v928
    %v935 = vadd.f32 %v887, %v930
    %v936 = vxor.u32 %v934, 2147483648
    %v937 = vmul.f32 %v936, 1.442695
    %v938 = vpow.pop %v937
    %v939 = vadd.f32 %v938, 1.0
    %v940 = vrcp.pop %v939
    %v941 = vmul.f32 1.0, %v940
    %v942 = vtanh.pop %v934
    %v943 = vmul.f32 %v941, %v845
    %945 = vrot.lane.b32.xlu0 %v942, 64
    %v946 = vpop.permute.xlu0 %945
    %v948 = vmul.f32 %v941, %v946
    %950 = vrot.lane.b32.xlu0 %v948, 32
    %v951 = vpop.permute.xlu0 %950
    %v953 = vadd.f32 %v943, %v951
    %v954 = vtanh.pop %v953
    %956 = vrot.lane.b32.xlu0 %v954, 64
    %v957 = vpop.permute.xlu0 %956
    %v959 = vmul.f32 %v941, %v957
    %v960 = vxor.u32 %v935, 2147483648
    %v961 = vmul.f32 %v960, 1.442695
    %v962 = vpow.pop %v961
    %v963 = vadd.f32 %v962, 1.0
    %v964 = vrcp.pop %v963
    %v965 = vmul.f32 1.0, %v964
    %v966 = vtanh.pop %v935
    %v967 = vmul.f32 %v965, %v869
    %969 = vrot.lane.b32.xlu0 %v966, 64
    %v970 = vpop.permute.xlu0 %969
    %v972 = vmul.f32 %v965, %v970
    %974 = vrot.lane.b32.xlu0 %v972, 32
    %v975 = vpop.permute.xlu0 %974
    %v977 = vadd.f32 %v967, %v975
    %v978 = vtanh.pop %v977
    %980 = vrot.lane.b32.xlu0 %v978, 64
    %v981 = vpop.permute.xlu0 %980
    %v983 = vmul.f32 %v965, %v981
    %985 = vrot.lane.b32.xlu0 %v959, 32
    %v986 = vpop.permute.xlu0 %985
    %988 = vst.msk [vmem:[%s436] sm:$0xff] %vm313, %v986
    %990 = vrot.lane.b32.xlu0 %v983, 64
    %v991 = vpop.permute.xlu0 %990
    %993 = vst.msk [vmem:[%s430] sm:$0xff] %vm320, %v991
    %v994 = vld [vmem:[%s171] sm:$0xff]
    %v995 = vld [vmem:[%s167 + $0x8] sm:$0xff]
    %v996 = vsel %vm313, %v986, %v991
    %v997 = vpack.c.bf16 %v996, %v996
    %v999 = vsel %vm214, %v997, 0
    %1001 = vmatprep.subr.bf16.mxu0 %v199
    %1002 = vmatpush1.bf16.msra.mxu0 %v198
    %1003 = vmatprep.subr.bf16.mxu0 %v201
    %1004 = vmatpush1.bf16.msra.mxu0 %v200
    %1005 = vmatprep.subr.bf16.mxu0 %v203
    %1006 = vmatpush1.bf16.msra.mxu0 %v202
    %1007 = vmatprep.subr.bf16.mxu0 %v205
    %1008 = vmatpush1.bf16.msra.mxu0 %v204
    %1009 = vmatprep.subr.bf16.mxu0 0
    %1010 = vmatpush1.bf16.msra.mxu0 0
    %1011 = vmatprep.subr.bf16.mxu0 0
    %1012 = vmatpush1.bf16.msra.mxu0 0
    %1013 = vmatprep.subr.bf16.mxu0 0
    %1014 = vmatpush1.bf16.msra.mxu0 0
    %1015 = vmatprep.subr.bf16.mxu0 0
    %1016 = vmatpush1.bf16.msra.mxu0 0
    %1017 = vmatprep.subr.bf16.mxu0 0
    %1018 = vmatpush1.bf16.msra.mxu0 0
    %1019 = vmatprep.subr.bf16.mxu0 0
    %1020 = vmatpush1.bf16.msra.mxu0 0
    %1021 = vmatprep.subr.bf16.mxu0 0
    %1022 = vmatpush1.bf16.msra.mxu0 0
    %1023 = vmatprep.subr.bf16.mxu0 0
    %1024 = vmatpush1.bf16.msra.mxu0 0
    %1025 = vmatprep.subr.bf16.mxu0 0
    %1026 = vmatpush1.bf16.msra.mxu0 0
    %1027 = vmatprep.subr.bf16.mxu0 0
    %1028 = vmatpush1.bf16.msra.mxu0 0
    %1029 = vmatprep.subr.bf16.mxu0 0
    %1030 = vmatpush1.bf16.msra.mxu0 0
    %1031 = vmatprep.subr.bf16.mxu0 0
    %1032 = vmatpush1.bf16.msra.mxu0 0
    %1033 = vmatprep.mubr.bf16.mxu0 0
    %1034 = vmatmul.mubr.bf16.gmra.mrb[0].mxu0 %v999
    %v1035 = vpop.f32.mrb[0].mxu0
    %v1036 = vadd.f32 0.0, %v1035
    %v1037 = vpop.f32.mrb[0].mxu0
    %v1038 = vadd.f32 0.0, %v1037
    %v1039 = vpop.f32.mrb[0].mxu0
    %v1040 = vpop.f32.mrb[0].mxu0
    %1041 = vdwg.mxu0
    %v1042 = vadd.f32 %v994, %v1036
    %v1043 = vadd.f32 %v995, %v1038
    %v1044 = vxor.u32 %v1042, 2147483648
    %v1045 = vmul.f32 %v1044, 1.442695
    %v1046 = vpow.pop %v1045
    %v1047 = vadd.f32 %v1046, 1.0
    %v1048 = vrcp.pop %v1047
    %v1049 = vmul.f32 1.0, %v1048
    %v1050 = vtanh.pop %v1042
    %v1051 = vmul.f32 %v1049, %v953
    %1053 = vrot.lane.b32.xlu0 %v1050, 64
    %v1054 = vpop.permute.xlu0 %1053
    %v1056 = vmul.f32 %v1049, %v1054
    %1058 = vrot.lane.b32.xlu0 %v1056, 32
    %v1059 = vpop.permute.xlu0 %1058
    %v1061 = vadd.f32 %v1051, %v1059
    %v1062 = vtanh.pop %v1061
    %1064 = vrot.lane.b32.xlu0 %v1062, 64
    %v1065 = vpop.permute.xlu0 %1064
    %v1067 = vmul.f32 %v1049, %v1065
    %v1068 = vxor.u32 %v1043, 2147483648
    %v1069 = vmul.f32 %v1068, 1.442695
    %v1070 = vpow.pop %v1069
    %v1071 = vadd.f32 %v1070, 1.0
    %v1072 = vrcp.pop %v1071
    %v1073 = vmul.f32 1.0, %v1072
    %v1074 = vtanh.pop %v1043
    %v1075 = vmul.f32 %v1073, %v977
    %1077 = vrot.lane.b32.xlu0 %v1074, 64
    %v1078 = vpop.permute.xlu0 %1077
    %v1080 = vmul.f32 %v1073, %v1078
    %1082 = vrot.lane.b32.xlu0 %v1080, 32
    %v1083 = vpop.permute.xlu0 %1082
    %v1085 = vadd.f32 %v1075, %v1083
    %v1086 = vtanh.pop %v1085
    %1088 = vrot.lane.b32.xlu0 %v1086, 64
    %v1089 = vpop.permute.xlu0 %1088
    %v1091 = vmul.f32 %v1073, %v1089
    %1093 = vrot.lane.b32.xlu0 %v1067, 32
    %v1094 = vpop.permute.xlu0 %1093
    %1096 = vst.msk [vmem:[%s319] sm:$0xff] %vm313, %v1094
    %1098 = vrot.lane.b32.xlu0 %v1091, 64
    %v1099 = vpop.permute.xlu0 %1098
    %1101 = vst.msk [vmem:[#allocation3] sm:$0xff] %vm320, %v1099
    // Predicated region
    $region18: #{tpu_custom_call.1} parent=1 // pred_check
      _
    $region19: #{tpu_custom_call.1} parent=1 // pred_check_branch
      %1103 = sbr.rel (0) target = $region21
    $region20: #{tpu_custom_call.1} parent=1 // pred_region
      %s1105 = ssub.s32 1024, 1024
      %1106 = vsyncadd [#allocation4], %s1105
      %s1107 = sshll.u32 [#allocation3], 4
      %s1108 = int_to_ptr.vmem [resolvable:$true] %s1107
      %1113 = dma.vmem_to_hbm [thread:$0]  %s1108, 1024, %s4, [#allocation4], 128, 128, 8
    $region21: #{tpu_custom_call.1} parent=1 // pred_fallthru
      _
    // Predicated region
    $region22: #{tpu_custom_call.1} parent=1 // pred_check
      _
    $region23: #{tpu_custom_call.1} parent=1 // pred_check_branch
      %1115 = sbr.rel (0) target = $region25
    $region24: #{tpu_custom_call.1} parent=1 // pred_region
      %1116 = dma.done [#allocation4], 1024
    $region25: #{tpu_custom_call.1} parent=1 // pred_fallthru
      _
    %1117 = vsyncpa [#allocation4], 1

</llo_original>
